<compile_context>
chip_gen: v7x
topology: tpu7x:2x2x1
jax: 0.10.0
libtpu: 0.0.40
codegen_flags: <defaults>
</compile_context>

<pallas_src>
import functools

import numpy as np
import jax
import jax.numpy as jnp
from jax.experimental import pallas as pl
from jax.experimental.pallas import tpu as pltpu

# labels8 grouping from the reference module (covers labels 0..13 exactly once).
LABELS8 = {
    0: [0],
    1: [1, 2, 4, 7, 8, 9, 10, 11],
    2: [3],
    3: [5],
    4: [6],
    5: [12],
    6: [13],
}
NUM_GROUPS = 7
NUM_LABELS = 14
POOL_CH = 22        # warp-input channels whose spatial mean feeds the kp heads
POOL_PAD = 24       # padded to a sublane multiple for the accumulator block

# (7, 14) group-indicator matrix: GROUP_MAT[g, label] = 1 iff label in group g.
# Used as a tiny matmul so the grouping needs no per-row concatenation.
_GROUP_MAT = np.zeros((NUM_GROUPS, NUM_LABELS), dtype=np.float32)
for _g, _labels in LABELS8.items():
    for _l in _labels:
        _GROUP_MAT[_g, _l] = 1.0


# ----------------------------- kernel helpers ------------------------------

def _argmax0(x):
    """First-max argmax along axis 0 (channel/sublane axis). x:(C,N) -> (1,N) i32."""
    mx = jnp.max(x, axis=0, keepdims=True)
    idx = jax.lax.broadcasted_iota(jnp.int32, x.shape, 0)
    cand = jnp.where(x == mx, idx, jnp.int32(x.shape[0]))
    return jnp.min(cand, axis=0, keepdims=True)


def _group7(logits, gmat):
    """logits:(14,T) -> labels8-grouped one-hot (7,T) via a small MXU matmul."""
    amax = _argmax0(logits)                                              # (1,T) i32
    lbl = jax.lax.broadcasted_iota(jnp.int32, (NUM_LABELS, logits.shape[1]), 0)
    onehot = (lbl == amax).astype(jnp.float32)                           # (14,T)
    return jnp.dot(gmat, onehot, preferred_element_type=jnp.float32)     # (7,T)


# ------------------------------ fused kernel --------------------------------

def _fused_kernel(is_train,
                  img_ref, imgag_ref, pag_ref, pall_ref, pose_ref, cm_ref,
                  gmat_ref, segw_ref, segb_ref, warpw_ref, warpb_ref,
                  ppred_ref, ppedge_ref, parsea_ref, tryon_ref, warped_ref,
                  pclothes_ref, refin_ref, dmotion_ref, pooled_ref):
    t = pl.program_id(1)
    gmat = gmat_ref[...]                                  # (7, 14)

    # --- argmax -> one-hot -> labels8 grouping for both parse maps ---
    parse = _group7(pag_ref[0], gmat)                     # (7, T)   (not returned)
    parse_a = _group7(pall_ref[0], gmat)                  # (7, T)
    parsea_ref[0] = parse_a

    cm = cm_ref[0]                                        # (3, T)
    imga = imgag_ref[0]                                   # (3, T)
    pose = pose_ref[0]                                    # (3, T)
    img = img_ref[0]                                      # (3, T)

    # TODO(synk): self.seg is an externally injected module; stand-in is a
    # deterministic 1x1-conv head.  seg input order [c_masked|img_agnostic|parse|pose]
    # is realized via sliced-weight matmuls (no concatenated buffer anywhere).
    sw = segw_ref[...]                                    # (7, 16)
    pp = (jnp.dot(sw[:, 0:3], cm, preferred_element_type=jnp.float32)
          + jnp.dot(sw[:, 3:6], imga, preferred_element_type=jnp.float32)
          + jnp.dot(sw[:, 6:13], parse, preferred_element_type=jnp.float32)
          + jnp.dot(sw[:, 13:16], pose, preferred_element_type=jnp.float32)
          + segb_ref[...])                                # (7, T)

    # F.normalize(parse_pred) over channels (p=2, eps=1e-12) using EUP rsqrt.
    ssq = jnp.sum(pp * pp, axis=0, keepdims=True)         # (1, T)
    ppn = pp * jax.lax.rsqrt(jnp.maximum(ssq, 1e-24))
    ppred_ref[0] = ppn

    # parse_pred_edge = (argmax(parse_pred) == 2)  ("upper" class)
    pp_edge = (_argmax0(ppn) == 2).astype(jnp.float32)    # (1, T)
    ppedge_ref[0] = pp_edge
    # person_clothes_edge: parse_a group rows are already one-hot -> read row 2.
    pc_edge = parse_a[2:3, :]                             # (1, T)
    pclothes = img * pc_edge
    pclothes_ref[0] = pclothes

    if is_train:
        edge, gen_parse = pc_edge, parse_a
    else:
        edge, gen_parse = pp_edge, ppn
    ref_in = jnp.concatenate([edge, edge, edge], axis=0)  # (3, T)
    refin_ref[0] = ref_in

    # TODO(synk): self.warp is externally injected; stand-in is 1x1-conv heads for
    # tryon / warped_out / dense_motion.  Input order
    # [c_masked|person_clothes|pose|img_agnostic|ref_input|gen_parse] via sliced weights.
    ww = warpw_ref[...]                                   # (8, 22)
    wh = (jnp.dot(ww[:, 0:3], cm, preferred_element_type=jnp.float32)
          + jnp.dot(ww[:, 3:6], pclothes, preferred_element_type=jnp.float32)
          + jnp.dot(ww[:, 6:9], pose, preferred_element_type=jnp.float32)
          + jnp.dot(ww[:, 9:12], imga, preferred_element_type=jnp.float32)
          + jnp.dot(ww[:, 12:15], ref_in, preferred_element_type=jnp.float32)
          + jnp.dot(ww[:, 15:22], gen_parse, preferred_element_type=jnp.float32)
          + warpb_ref[...])                               # (8, T)
    tryon_ref[0] = jnp.tanh(wh[0:3])                      # tanh fused (EUP, ~free)
    warped_ref[0] = jnp.tanh(wh[3:6])
    dmotion_ref[0] = wh[6:8]

    # --- pooled spatial mean feeding the tiny kp heads ---
    # Per-tile partial channel sums accumulated in an output block that stays
    # resident across the ("arbitrary") HW grid axis; finalized by the writeback
    # when the batch index changes.  Avoids materializing warp_in in HBM.
    @pl.when(t == 0)
    def _():
        pooled_ref[...] = jnp.zeros_like(pooled_ref)

    def _acc(lo, hi, x):
        s = jnp.sum(x, axis=1, keepdims=True)             # (C, 1) lane reduce (XLU)
        pooled_ref[0, lo:hi, 0:1] = pooled_ref[0, lo:hi, 0:1] + s

    _acc(0, 3, cm)
    _acc(3, 6, pclothes)
    _acc(6, 9, pose)
    _acc(9, 12, imga)
    _acc(12, 15, ref_in)
    _acc(15, 22, gen_parse)


# ------------------------------ pallas wrapper -------------------------------

def _flatten(x):
    b, c, h, w = x.shape
    return x.reshape(b, c, h * w)


def _pick_tile_hw(hw, cap=16384):
    # Largest multiple of 128 that divides HW, capped for v7x's 64 MiB VMEM
    # (<= ~16k lanes with ~70 live f32 channels, double-buffered).
    # v5e / v6e (128 MiB VMEM) can profitably raise `cap` to 32768-65536.
    t = max(128, (min(hw, cap) // 128) * 128)
    while hw % t:
        t -= 128
    return t


def tryon_forward(params, opt, image, img_agnostic, parse_agnostic, parse_all,
                  pose, c_masked, dropout_flag, dropout_p, step, tile_hw=None):
    del dropout_flag, dropout_p, step   # consumed only by the injected warp model
    H, W = opt["height"], opt["width"]
    B = image.shape[0]
    HW = H * W
    assert HW % 128 == 0, "H*W must be a multiple of 128 (pad spatially otherwise)"
    tile = tile_hw if tile_hw is not None else _pick_tile_hw(HW)
    n_tiles = HW // tile
    is_train = (opt["phase"] == "train")

    img_f = _flatten(image).astype(jnp.float32)
    imgag_f = _flatten(img_agnostic).astype(jnp.float32)
    pag_f = _flatten(parse_agnostic).astype(jnp.float32)
    pall_f = _flatten(parse_all).astype(jnp.float32)
    pose_f = _flatten(pose).astype(jnp.float32)
    cm_f = _flatten(c_masked).astype(jnp.float32)
    gmat = jnp.asarray(_GROUP_MAT)

    def tile_spec(c):
        return pl.BlockSpec((1, c, tile), lambda b, t: (b, 0, t))

    def full_spec(shape):
        return pl.BlockSpec(tuple(shape), lambda b, t: (0,) * len(shape))

    in_specs = [
        tile_spec(3), tile_spec(3), tile_spec(NUM_LABELS), tile_spec(NUM_LABELS),
        tile_spec(3), tile_spec(3),
        full_spec(gmat.shape),
        full_spec(params["seg_w"].shape), full_spec(params["seg_b"].shape),
        full_spec(params["warp_w"].shape), full_spec(params["warp_b"].shape),
    ]
    out_shapes = (
        jax.ShapeDtypeStruct((B, NUM_GROUPS, HW), jnp.float32),   # parse_pred
        jax.ShapeDtypeStruct((B, 1, HW), jnp.float32),            # parse_pred_edge
        jax.ShapeDtypeStruct((B, NUM_GROUPS, HW), jnp.float32),   # parse_a
        jax.ShapeDtypeStruct((B, 3, HW), jnp.float32),            # tryon
        jax.ShapeDtypeStruct((B, 3, HW), jnp.float32),            # warped_out
        jax.ShapeDtypeStruct((B, 3, HW), jnp.float32),            # person_clothes
        jax.ShapeDtypeStruct((B, 3, HW), jnp.float32),            # ref_input
        jax.ShapeDtypeStruct((B, 2, HW), jnp.float32),            # dense_motion
        jax.ShapeDtypeStruct((B, POOL_PAD, 128), jnp.float32),    # pooled partial sums
    )
    out_specs = (
        tile_spec(NUM_GROUPS), tile_spec(1), tile_spec(NUM_GROUPS),
        tile_spec(3), tile_spec(3), tile_spec(3), tile_spec(3), tile_spec(2),
        # accumulator: resident across the HW axis, flushed when the batch index changes
        pl.BlockSpec((1, POOL_PAD, 128), lambda b, t: (b, 0, 0)),
    )

    fused = pl.pallas_call(
        functools.partial(_fused_kernel, is_train),
        out_shape=out_shapes,
        grid=(B, n_tiles),
        in_specs=in_specs,
        out_specs=out_specs,
        compiler_params=pltpu.CompilerParams(
            # Batch axis feeds the megacore (2 TCs on v7x); the HW axis carries
            # the pooled accumulator so it must stay sequential ("arbitrary").
            dimension_semantics=("parallel", "arbitrary"),
            vmem_limit_bytes=64 * 1024 * 1024,
        ),
    )

    (parse_pred, parse_pred_edge, parse_a, tryon, warped_out,
     person_clothes, ref_input, dense_motion, pooled_sum) = fused(
        img_f, imgag_f, pag_f, pall_f, pose_f, cm_f,
        gmat, params["seg_w"], params["seg_b"], params["warp_w"], params["warp_b"])

    # TODO(synk): tiny kp-head stand-ins (the real warp model produces these);
    # they consume the spatial mean of the 22 warp-input channels accumulated in-kernel.
    pooled = pooled_sum[:, :POOL_CH, 0] / jnp.float32(HW)                 # (B, 22)
    kp_source = jnp.tanh(pooled @ params["kp_src_w"]).reshape(B, 4, 2)
    kp_ref = jnp.tanh(pooled @ params["kp_ref_w"]).reshape(B, 4, 2)

    uf = lambda x: x.reshape(B, x.shape[1], H, W)
    # same tuple order as the PyTorch module
    return (uf(parse_pred), uf(parse_pred_edge), uf(parse_a), uf(tryon),
            uf(warped_out), uf(person_clothes), uf(ref_input),
            kp_source, kp_ref, uf(dense_motion))


def init_params(key):
    ks = jax.random.split(key, 6)

    def w(k, shape, scale=0.1):
        return (scale * jax.random.normal(k, shape)).astype(jnp.float32)

    return {
        "seg_w": w(ks[0], (7, 16)),     # seg stand-in: 16 -> 7 channels
        "seg_b": w(ks[1], (7, 1)),
        "warp_w": w(ks[2], (8, 22)),    # warp stand-in: 22 -> 3+3+2 channels
        "warp_b": w(ks[3], (8, 1)),
        "kp_src_w": w(ks[4], (22, 8)),  # 4 keypoints x 2
        "kp_ref_w": w(ks[5], (22, 8)),
    }


if __name__ == "__main__":
    opt = {"height": 16, "width": 16, "label_nc": 14, "phase": "train",
           "isTrain": True, "resize_or_crop": "none"}
    B, H, W, NC = 2, opt["height"], opt["width"], opt["label_nc"]

    key = jax.random.PRNGKey(0)
    keys = jax.random.split(key, 7)
    image = jax.random.normal(keys[0], (B, 3, H, W), jnp.float32)
    img_agnostic = jax.random.normal(keys[1], (B, 3, H, W), jnp.float32)
    parse_agnostic = jax.random.normal(keys[2], (B, NC, H, W), jnp.float32)
    parse_all = jax.random.normal(keys[3], (B, NC, H, W), jnp.float32)
    pose = jax.random.normal(keys[4], (B, 3, H, W), jnp.float32)
    c_masked = jax.random.normal(keys[5], (B, 3, H, W), jnp.float32)
    params = init_params(keys[6])

    # tile_hw=128 -> 2 spatial tiles, exercising the pooled accumulator path.
    outs = tryon_forward(params, opt, image, img_agnostic, parse_agnostic,
                         parse_all, pose, c_masked,
                         dropout_flag=False, dropout_p=0.0, step=0,
                         tile_hw=128)
    jax.block_until_ready(outs)
    print("KERNEL_OK")
</pallas_src>

<mosaic_0001>
module attributes {stable_mosaic.version = 11 : i64} {
  func.func @_fused_kernel(%arg0: i32, %arg1: i32, %arg2: memref<1x3x128xf32, #tpu.memory_space<vmem>>, %arg3: memref<1x3x128xf32, #tpu.memory_space<vmem>>, %arg4: memref<1x14x128xf32, #tpu.memory_space<vmem>>, %arg5: memref<1x14x128xf32, #tpu.memory_space<vmem>>, %arg6: memref<1x3x128xf32, #tpu.memory_space<vmem>>, %arg7: memref<1x3x128xf32, #tpu.memory_space<vmem>>, %arg8: memref<7x14xf32, #tpu.memory_space<vmem>>, %arg9: memref<7x16xf32, #tpu.memory_space<vmem>>, %arg10: memref<7x1xf32, #tpu.memory_space<vmem>>, %arg11: memref<8x22xf32, #tpu.memory_space<vmem>>, %arg12: memref<8x1xf32, #tpu.memory_space<vmem>>, %arg13: memref<1x7x128xf32, #tpu.memory_space<vmem>>, %arg14: memref<1x1x128xf32, #tpu.memory_space<vmem>>, %arg15: memref<1x7x128xf32, #tpu.memory_space<vmem>>, %arg16: memref<1x3x128xf32, #tpu.memory_space<vmem>>, %arg17: memref<1x3x128xf32, #tpu.memory_space<vmem>>, %arg18: memref<1x3x128xf32, #tpu.memory_space<vmem>>, %arg19: memref<1x3x128xf32, #tpu.memory_space<vmem>>, %arg20: memref<1x2x128xf32, #tpu.memory_space<vmem>>, %arg21: memref<1x24x128xf32, #tpu.memory_space<vmem>>) attributes {dimension_semantics = [#tpu.dimension_semantics<parallel>, #tpu.dimension_semantics<arbitrary>], iteration_bounds = array<i64: 2, 2>, scalar_prefetch = 0 : i64, scratch_operands = 0 : i64, tpu.core_type = #tpu.core_type<tc>, window_params = [{transform_indices = @transform_0, window_bounds = array<i64: 1, 3, 128>}, {transform_indices = @transform_1, window_bounds = array<i64: 1, 3, 128>}, {transform_indices = @transform_2, window_bounds = array<i64: 1, 14, 128>}, {transform_indices = @transform_3, window_bounds = array<i64: 1, 14, 128>}, {transform_indices = @transform_4, window_bounds = array<i64: 1, 3, 128>}, {transform_indices = @transform_5, window_bounds = array<i64: 1, 3, 128>}, {pipeline_mode = #tpu.pipeline_mode<synchronous>, transform_indices = @transform_6, window_bounds = array<i64: 7, 14>}, {pipeline_mode = #tpu.pipeline_mode<synchronous>, transform_indices = @transform_7, window_bounds = array<i64: 7, 16>}, {pipeline_mode = #tpu.pipeline_mode<synchronous>, transform_indices = @transform_8, window_bounds = array<i64: 7, 1>}, {pipeline_mode = #tpu.pipeline_mode<synchronous>, transform_indices = @transform_9, window_bounds = array<i64: 8, 22>}, {pipeline_mode = #tpu.pipeline_mode<synchronous>, transform_indices = @transform_10, window_bounds = array<i64: 8, 1>}, {transform_indices = @transform_11, window_bounds = array<i64: 1, 7, 128>}, {transform_indices = @transform_12, window_bounds = array<i64: 1, 1, 128>}, {transform_indices = @transform_13, window_bounds = array<i64: 1, 7, 128>}, {transform_indices = @transform_14, window_bounds = array<i64: 1, 3, 128>}, {transform_indices = @transform_15, window_bounds = array<i64: 1, 3, 128>}, {transform_indices = @transform_16, window_bounds = array<i64: 1, 3, 128>}, {transform_indices = @transform_17, window_bounds = array<i64: 1, 3, 128>}, {transform_indices = @transform_18, window_bounds = array<i64: 1, 2, 128>}, {transform_indices = @transform_19, window_bounds = array<i64: 1, 24, 128>}]} {
    %c0 = arith.constant 0 : index
    %c0_0 = arith.constant 0 : index
    %0 = vector.load %arg8[%c0, %c0_0] : memref<7x14xf32, #tpu.memory_space<vmem>>, vector<7x14xf32>
    %c0_1 = arith.constant 0 : index
    %c0_2 = arith.constant 0 : index
    %c0_3 = arith.constant 0 : index
    %1 = vector.load %arg4[%c0_1, %c0_2, %c0_3] : memref<1x14x128xf32, #tpu.memory_space<vmem>>, vector<1x14x128xf32>
    %2 = vector.shape_cast %1 : vector<1x14x128xf32> to vector<14x128xf32>
    %cst = arith.constant dense<0xFF800000> : vector<128xf32>
    %3 = vector.multi_reduction <maximumf>, %2, %cst [0] : vector<14x128xf32> to vector<128xf32>
    %4 = vector.shape_cast %3 : vector<128xf32> to vector<1x128xf32>
    %5 = tpu.iota {dimensions = array<i32: 0>} : vector<14x128xi32>
    %6 = vector.broadcast %4 : vector<1x128xf32> to vector<14x128xf32>
    %7 = arith.cmpf oeq, %2, %6 : vector<14x128xf32>
    %c14_i32 = arith.constant 14 : i32
    %8 = vector.broadcast %c14_i32 : i32 to vector<14x128xi32>
    %9 = arith.select %7, %5, %8 : vector<14x128xi1>, vector<14x128xi32>
    %cst_4 = arith.constant dense<2147483647> : vector<128xi32>
    %10 = vector.multi_reduction <minsi>, %9, %cst_4 [0] : vector<14x128xi32> to vector<128xi32>
    %11 = vector.shape_cast %10 : vector<128xi32> to vector<1x128xi32>
    %12 = tpu.iota {dimensions = array<i32: 0>} : vector<14x128xi32>
    %13 = vector.broadcast %11 : vector<1x128xi32> to vector<14x128xi32>
    %14 = arith.cmpi eq, %12, %13 : vector<14x128xi32>
    %15 = arith.extui %14 : vector<14x128xi1> to vector<14x128xi32>
    %16 = arith.sitofp %15 : vector<14x128xi32> to vector<14x128xf32>
    %cst_5 = arith.constant dense<0.000000e+00> : vector<7x128xf32>
    %17 = tpu.matmul %0, %16, %cst_5 {dimension_numbers = #tpu.dot_dimension_numbers<[1], [0], [0], [1], [0, 0, 1, 1], [], []>} : vector<7x14xf32>, vector<14x128xf32>, vector<7x128xf32> -> vector<7x128xf32>
    %c0_6 = arith.constant 0 : index
    %c0_7 = arith.constant 0 : index
    %c0_8 = arith.constant 0 : index
    %18 = vector.load %arg5[%c0_6, %c0_7, %c0_8] : memref<1x14x128xf32, #tpu.memory_space<vmem>>, vector<1x14x128xf32>
    %19 = vector.shape_cast %18 : vector<1x14x128xf32> to vector<14x128xf32>
    %cst_9 = arith.constant dense<0xFF800000> : vector<128xf32>
    %20 = vector.multi_reduction <maximumf>, %19, %cst_9 [0] : vector<14x128xf32> to vector<128xf32>
    %21 = vector.shape_cast %20 : vector<128xf32> to vector<1x128xf32>
    %22 = tpu.iota {dimensions = array<i32: 0>} : vector<14x128xi32>
    %23 = vector.broadcast %21 : vector<1x128xf32> to vector<14x128xf32>
    %24 = arith.cmpf oeq, %19, %23 : vector<14x128xf32>
    %c14_i32_10 = arith.constant 14 : i32
    %25 = vector.broadcast %c14_i32_10 : i32 to vector<14x128xi32>
    %26 = arith.select %24, %22, %25 : vector<14x128xi1>, vector<14x128xi32>
    %cst_11 = arith.constant dense<2147483647> : vector<128xi32>
    %27 = vector.multi_reduction <minsi>, %26, %cst_11 [0] : vector<14x128xi32> to vector<128xi32>
    %28 = vector.shape_cast %27 : vector<128xi32> to vector<1x128xi32>
    %29 = tpu.iota {dimensions = array<i32: 0>} : vector<14x128xi32>
    %30 = vector.broadcast %28 : vector<1x128xi32> to vector<14x128xi32>
    %31 = arith.cmpi eq, %29, %30 : vector<14x128xi32>
    %32 = arith.extui %31 : vector<14x128xi1> to vector<14x128xi32>
    %33 = arith.sitofp %32 : vector<14x128xi32> to vector<14x128xf32>
    %cst_12 = arith.constant dense<0.000000e+00> : vector<7x128xf32>
    %34 = tpu.matmul %0, %33, %cst_12 {dimension_numbers = #tpu.dot_dimension_numbers<[1], [0], [0], [1], [0, 0, 1, 1], [], []>} : vector<7x14xf32>, vector<14x128xf32>, vector<7x128xf32> -> vector<7x128xf32>
    %c0_13 = arith.constant 0 : index
    %c0_14 = arith.constant 0 : index
    %c0_15 = arith.constant 0 : index
    %35 = vector.load %arg15[%c0_13, %c0_14, %c0_15] : memref<1x7x128xf32, #tpu.memory_space<vmem>>, vector<1x7x128xf32>
    %36 = vector.shape_cast %35 : vector<1x7x128xf32> to vector<7x128xf32>
    %37 = vector.shape_cast %34 : vector<7x128xf32> to vector<1x7x128xf32>
    tpu.vector_store %arg15[%c0_13, %c0_14, %c0_15], %37 {strides = array<i32>} : memref<1x7x128xf32, #tpu.memory_space<vmem>>, vector<1x7x128xf32>,
    %c0_16 = arith.constant 0 : index
    %c0_17 = arith.constant 0 : index
    %c0_18 = arith.constant 0 : index
    %38 = vector.load %arg7[%c0_16, %c0_17, %c0_18] : memref<1x3x128xf32, #tpu.memory_space<vmem>>, vector<1x3x128xf32>
    %39 = vector.shape_cast %38 : vector<1x3x128xf32> to vector<3x128xf32>
    %c0_19 = arith.constant 0 : index
    %c0_20 = arith.constant 0 : index
    %c0_21 = arith.constant 0 : index
    %40 = vector.load %arg3[%c0_19, %c0_20, %c0_21] : memref<1x3x128xf32, #tpu.memory_space<vmem>>, vector<1x3x128xf32>
    %41 = vector.shape_cast %40 : vector<1x3x128xf32> to vector<3x128xf32>
    %c0_22 = arith.constant 0 : index
    %c0_23 = arith.constant 0 : index
    %c0_24 = arith.constant 0 : index
    %42 = vector.load %arg6[%c0_22, %c0_23, %c0_24] : memref<1x3x128xf32, #tpu.memory_space<vmem>>, vector<1x3x128xf32>
    %43 = vector.shape_cast %42 : vector<1x3x128xf32> to vector<3x128xf32>
    %c0_25 = arith.constant 0 : index
    %c0_26 = arith.constant 0 : index
    %c0_27 = arith.constant 0 : index
    %44 = vector.load %arg2[%c0_25, %c0_26, %c0_27] : memref<1x3x128xf32, #tpu.memory_space<vmem>>, vector<1x3x128xf32>
    %45 = vector.shape_cast %44 : vector<1x3x128xf32> to vector<3x128xf32>
    %c0_28 = arith.constant 0 : index
    %c0_29 = arith.constant 0 : index
    %46 = vector.load %arg9[%c0_28, %c0_29] : memref<7x16xf32, #tpu.memory_space<vmem>>, vector<7x16xf32>
    %47 = vector.extract_strided_slice %46 {offsets = [0, 0], sizes = [7, 3], strides = [1, 1]} : vector<7x16xf32> to vector<7x3xf32>
    %cst_30 = arith.constant dense<0.000000e+00> : vector<7x128xf32>
    %48 = tpu.matmul %47, %39, %cst_30 {dimension_numbers = #tpu.dot_dimension_numbers<[1], [0], [0], [1], [0, 0, 1, 1], [], []>} : vector<7x3xf32>, vector<3x128xf32>, vector<7x128xf32> -> vector<7x128xf32>
    %49 = vector.extract_strided_slice %46 {offsets = [0, 3], sizes = [7, 3], strides = [1, 1]} : vector<7x16xf32> to vector<7x3xf32>
    %cst_31 = arith.constant dense<0.000000e+00> : vector<7x128xf32>
    %50 = tpu.matmul %49, %41, %cst_31 {dimension_numbers = #tpu.dot_dimension_numbers<[1], [0], [0], [1], [0, 0, 1, 1], [], []>} : vector<7x3xf32>, vector<3x128xf32>, vector<7x128xf32> -> vector<7x128xf32>
    %51 = arith.addf %48, %50 : vector<7x128xf32>
    %52 = vector.extract_strided_slice %46 {offsets = [0, 6], sizes = [7, 7], strides = [1, 1]} : vector<7x16xf32> to vector<7x7xf32>
    %cst_32 = arith.constant dense<0.000000e+00> : vector<7x128xf32>
    %53 = tpu.matmul %52, %17, %cst_32 {dimension_numbers = #tpu.dot_dimension_numbers<[1], [0], [0], [1], [0, 0, 1, 1], [], []>} : vector<7x7xf32>, vector<7x128xf32>, vector<7x128xf32> -> vector<7x128xf32>
    %54 = arith.addf %51, %53 : vector<7x128xf32>
    %55 = vector.extract_strided_slice %46 {offsets = [0, 13], sizes = [7, 3], strides = [1, 1]} : vector<7x16xf32> to vector<7x3xf32>
    %cst_33 = arith.constant dense<0.000000e+00> : vector<7x128xf32>
    %56 = tpu.matmul %55, %43, %cst_33 {dimension_numbers = #tpu.dot_dimension_numbers<[1], [0], [0], [1], [0, 0, 1, 1], [], []>} : vector<7x3xf32>, vector<3x128xf32>, vector<7x128xf32> -> vector<7x128xf32>
    %57 = arith.addf %54, %56 : vector<7x128xf32>
    %c0_34 = arith.constant 0 : index
    %c0_35 = arith.constant 0 : index
    %58 = vector.load %arg10[%c0_34, %c0_35] : memref<7x1xf32, #tpu.memory_space<vmem>>, vector<7x1xf32>
    %59 = vector.broadcast %58 : vector<7x1xf32> to vector<7x128xf32>
    %60 = arith.addf %57, %59 : vector<7x128xf32>
    %61 = arith.mulf %60, %60 : vector<7x128xf32>
    %cst_36 = arith.constant dense<0.000000e+00> : vector<128xf32>
    %62 = vector.multi_reduction <add>, %61, %cst_36 [0] : vector<7x128xf32> to vector<128xf32>
    %63 = vector.shape_cast %62 : vector<128xf32> to vector<1x128xf32>
    %cst_37 = arith.constant 1.000000e-24 : f32
    %64 = vector.broadcast %cst_37 : f32 to vector<1x128xf32>
    %65 = arith.maximumf %63, %64 : vector<1x128xf32>
    %66 = math.rsqrt %65 : vector<1x128xf32>
    %67 = vector.broadcast %66 : vector<1x128xf32> to vector<7x128xf32>
    %68 = arith.mulf %60, %67 : vector<7x128xf32>
    %c0_38 = arith.constant 0 : index
    %c0_39 = arith.constant 0 : index
    %c0_40 = arith.constant 0 : index
    %69 = vector.load %arg13[%c0_38, %c0_39, %c0_40] : memref<1x7x128xf32, #tpu.memory_space<vmem>>, vector<1x7x128xf32>
    %70 = vector.shape_cast %69 : vector<1x7x128xf32> to vector<7x128xf32>
    %71 = vector.shape_cast %68 : vector<7x128xf32> to vector<1x7x128xf32>
    tpu.vector_store %arg13[%c0_38, %c0_39, %c0_40], %71 {strides = array<i32>} : memref<1x7x128xf32, #tpu.memory_space<vmem>>, vector<1x7x128xf32>,
    %cst_41 = arith.constant dense<0xFF800000> : vector<128xf32>
    %72 = vector.multi_reduction <maximumf>, %68, %cst_41 [0] : vector<7x128xf32> to vector<128xf32>
    %73 = vector.shape_cast %72 : vector<128xf32> to vector<1x128xf32>
    %74 = tpu.iota {dimensions = array<i32: 0>} : vector<7x128xi32>
    %75 = vector.broadcast %73 : vector<1x128xf32> to vector<7x128xf32>
    %76 = arith.cmpf oeq, %68, %75 : vector<7x128xf32>
    %c7_i32 = arith.constant 7 : i32
    %77 = vector.broadcast %c7_i32 : i32 to vector<7x128xi32>
    %78 = arith.select %76, %74, %77 : vector<7x128xi1>, vector<7x128xi32>
    %cst_42 = arith.constant dense<2147483647> : vector<128xi32>
    %79 = vector.multi_reduction <minsi>, %78, %cst_42 [0] : vector<7x128xi32> to vector<128xi32>
    %80 = vector.shape_cast %79 : vector<128xi32> to vector<1x128xi32>
    %c2_i32 = arith.constant 2 : i32
    %81 = vector.broadcast %c2_i32 : i32 to vector<1x128xi32>
    %82 = arith.cmpi eq, %80, %81 : vector<1x128xi32>
    %83 = arith.extui %82 : vector<1x128xi1> to vector<1x128xi32>
    %84 = arith.sitofp %83 : vector<1x128xi32> to vector<1x128xf32>
    %c0_43 = arith.constant 0 : index
    %c0_44 = arith.constant 0 : index
    %c0_45 = arith.constant 0 : index
    %85 = vector.load %arg14[%c0_43, %c0_44, %c0_45] : memref<1x1x128xf32, #tpu.memory_space<vmem>>, vector<1x1x128xf32>
    %86 = vector.shape_cast %85 : vector<1x1x128xf32> to vector<1x128xf32>
    %87 = vector.shape_cast %84 : vector<1x128xf32> to vector<1x1x128xf32>
    tpu.vector_store %arg14[%c0_43, %c0_44, %c0_45], %87 {strides = array<i32>} : memref<1x1x128xf32, #tpu.memory_space<vmem>>, vector<1x1x128xf32>,
    %88 = vector.extract_strided_slice %34 {offsets = [2, 0], sizes = [1, 128], strides = [1, 1]} : vector<7x128xf32> to vector<1x128xf32>
    %89 = vector.broadcast %88 : vector<1x128xf32> to vector<3x128xf32>
    %90 = arith.mulf %45, %89 : vector<3x128xf32>
    %c0_46 = arith.constant 0 : index
    %c0_47 = arith.constant 0 : index
    %c0_48 = arith.constant 0 : index
    %91 = vector.load %arg18[%c0_46, %c0_47, %c0_48] : memref<1x3x128xf32, #tpu.memory_space<vmem>>, vector<1x3x128xf32>
    %92 = vector.shape_cast %91 : vector<1x3x128xf32> to vector<3x128xf32>
    %93 = vector.shape_cast %90 : vector<3x128xf32> to vector<1x3x128xf32>
    tpu.vector_store %arg18[%c0_46, %c0_47, %c0_48], %93 {strides = array<i32>} : memref<1x3x128xf32, #tpu.memory_space<vmem>>, vector<1x3x128xf32>,
    %94 = tpu.concatenate %88, %88, %88 in 0 : vector<1x128xf32>, vector<1x128xf32>, vector<1x128xf32> -> vector<3x128xf32>
    %c0_49 = arith.constant 0 : index
    %c0_50 = arith.constant 0 : index
    %c0_51 = arith.constant 0 : index
    %95 = vector.load %arg19[%c0_49, %c0_50, %c0_51] : memref<1x3x128xf32, #tpu.memory_space<vmem>>, vector<1x3x128xf32>
    %96 = vector.shape_cast %95 : vector<1x3x128xf32> to vector<3x128xf32>
    %97 = vector.shape_cast %94 : vector<3x128xf32> to vector<1x3x128xf32>
    tpu.vector_store %arg19[%c0_49, %c0_50, %c0_51], %97 {strides = array<i32>} : memref<1x3x128xf32, #tpu.memory_space<vmem>>, vector<1x3x128xf32>,
    %c0_52 = arith.constant 0 : index
    %c0_53 = arith.constant 0 : index
    %98 = vector.load %arg11[%c0_52, %c0_53] : memref<8x22xf32, #tpu.memory_space<vmem>>, vector<8x22xf32>
    %99 = vector.extract_strided_slice %98 {offsets = [0, 0], sizes = [8, 3], strides = [1, 1]} : vector<8x22xf32> to vector<8x3xf32>
    %cst_54 = arith.constant dense<0.000000e+00> : vector<8x128xf32>
    %100 = tpu.matmul %99, %39, %cst_54 {dimension_numbers = #tpu.dot_dimension_numbers<[1], [0], [0], [1], [0, 0, 1, 1], [], []>} : vector<8x3xf32>, vector<3x128xf32>, vector<8x128xf32> -> vector<8x128xf32>
    %101 = vector.extract_strided_slice %98 {offsets = [0, 3], sizes = [8, 3], strides = [1, 1]} : vector<8x22xf32> to vector<8x3xf32>
    %cst_55 = arith.constant dense<0.000000e+00> : vector<8x128xf32>
    %102 = tpu.matmul %101, %90, %cst_55 {dimension_numbers = #tpu.dot_dimension_numbers<[1], [0], [0], [1], [0, 0, 1, 1], [], []>} : vector<8x3xf32>, vector<3x128xf32>, vector<8x128xf32> -> vector<8x128xf32>
    %103 = arith.addf %100, %102 : vector<8x128xf32>
    %104 = vector.extract_strided_slice %98 {offsets = [0, 6], sizes = [8, 3], strides = [1, 1]} : vector<8x22xf32> to vector<8x3xf32>
    %cst_56 = arith.constant dense<0.000000e+00> : vector<8x128xf32>
    %105 = tpu.matmul %104, %43, %cst_56 {dimension_numbers = #tpu.dot_dimension_numbers<[1], [0], [0], [1], [0, 0, 1, 1], [], []>} : vector<8x3xf32>, vector<3x128xf32>, vector<8x128xf32> -> vector<8x128xf32>
    %106 = arith.addf %103, %105 : vector<8x128xf32>
    %107 = vector.extract_strided_slice %98 {offsets = [0, 9], sizes = [8, 3], strides = [1, 1]} : vector<8x22xf32> to vector<8x3xf32>
    %cst_57 = arith.constant dense<0.000000e+00> : vector<8x128xf32>
    %108 = tpu.matmul %107, %41, %cst_57 {dimension_numbers = #tpu.dot_dimension_numbers<[1], [0], [0], [1], [0, 0, 1, 1], [], []>} : vector<8x3xf32>, vector<3x128xf32>, vector<8x128xf32> -> vector<8x128xf32>
    %109 = arith.addf %106, %108 : vector<8x128xf32>
    %110 = vector.extract_strided_slice %98 {offsets = [0, 12], sizes = [8, 3], strides = [1, 1]} : vector<8x22xf32> to vector<8x3xf32>
    %cst_58 = arith.constant dense<0.000000e+00> : vector<8x128xf32>
    %111 = tpu.matmul %110, %94, %cst_58 {dimension_numbers = #tpu.dot_dimension_numbers<[1], [0], [0], [1], [0, 0, 1, 1], [], []>} : vector<8x3xf32>, vector<3x128xf32>, vector<8x128xf32> -> vector<8x128xf32>
    %112 = arith.addf %109, %111 : vector<8x128xf32>
    %113 = vector.extract_strided_slice %98 {offsets = [0, 15], sizes = [8, 7], strides = [1, 1]} : vector<8x22xf32> to vector<8x7xf32>
    %cst_59 = arith.constant dense<0.000000e+00> : vector<8x128xf32>
    %114 = tpu.matmul %113, %34, %cst_59 {dimension_numbers = #tpu.dot_dimension_numbers<[1], [0], [0], [1], [0, 0, 1, 1], [], []>} : vector<8x7xf32>, vector<7x128xf32>, vector<8x128xf32> -> vector<8x128xf32>
    %115 = arith.addf %112, %114 : vector<8x128xf32>
    %c0_60 = arith.constant 0 : index
    %c0_61 = arith.constant 0 : index
    %116 = vector.load %arg12[%c0_60, %c0_61] : memref<8x1xf32, #tpu.memory_space<vmem>>, vector<8x1xf32>
    %117 = vector.broadcast %116 : vector<8x1xf32> to vector<8x128xf32>
    %118 = arith.addf %115, %117 : vector<8x128xf32>
    %119 = vector.extract_strided_slice %118 {offsets = [0, 0], sizes = [3, 128], strides = [1, 1]} : vector<8x128xf32> to vector<3x128xf32>
    %120 = math.tanh %119 : vector<3x128xf32>
    %c0_62 = arith.constant 0 : index
    %c0_63 = arith.constant 0 : index
    %c0_64 = arith.constant 0 : index
    %121 = vector.load %arg16[%c0_62, %c0_63, %c0_64] : memref<1x3x128xf32, #tpu.memory_space<vmem>>, vector<1x3x128xf32>
    %122 = vector.shape_cast %121 : vector<1x3x128xf32> to vector<3x128xf32>
    %123 = vector.shape_cast %120 : vector<3x128xf32> to vector<1x3x128xf32>
    tpu.vector_store %arg16[%c0_62, %c0_63, %c0_64], %123 {strides = array<i32>} : memref<1x3x128xf32, #tpu.memory_space<vmem>>, vector<1x3x128xf32>,
    %124 = vector.extract_strided_slice %118 {offsets = [3, 0], sizes = [3, 128], strides = [1, 1]} : vector<8x128xf32> to vector<3x128xf32>
    %125 = math.tanh %124 : vector<3x128xf32>
    %c0_65 = arith.constant 0 : index
    %c0_66 = arith.constant 0 : index
    %c0_67 = arith.constant 0 : index
    %126 = vector.load %arg17[%c0_65, %c0_66, %c0_67] : memref<1x3x128xf32, #tpu.memory_space<vmem>>, vector<1x3x128xf32>
    %127 = vector.shape_cast %126 : vector<1x3x128xf32> to vector<3x128xf32>
    %128 = vector.shape_cast %125 : vector<3x128xf32> to vector<1x3x128xf32>
    tpu.vector_store %arg17[%c0_65, %c0_66, %c0_67], %128 {strides = array<i32>} : memref<1x3x128xf32, #tpu.memory_space<vmem>>, vector<1x3x128xf32>,
    %129 = vector.extract_strided_slice %118 {offsets = [6, 0], sizes = [2, 128], strides = [1, 1]} : vector<8x128xf32> to vector<2x128xf32>
    %c0_68 = arith.constant 0 : index
    %c0_69 = arith.constant 0 : index
    %c0_70 = arith.constant 0 : index
    %130 = vector.load %arg20[%c0_68, %c0_69, %c0_70] : memref<1x2x128xf32, #tpu.memory_space<vmem>>, vector<1x2x128xf32>
    %131 = vector.shape_cast %130 : vector<1x2x128xf32> to vector<2x128xf32>
    %132 = vector.shape_cast %129 : vector<2x128xf32> to vector<1x2x128xf32>
    tpu.vector_store %arg20[%c0_68, %c0_69, %c0_70], %132 {strides = array<i32>} : memref<1x2x128xf32, #tpu.memory_space<vmem>>, vector<1x2x128xf32>,
    %c0_i32 = arith.constant 0 : i32
    %133 = arith.cmpi eq, %arg1, %c0_i32 : i32
    %134 = arith.extui %133 : i1 to i32
    %c0_i32_71 = arith.constant 0 : i32
    %135 = arith.cmpi ne, %134, %c0_i32_71 : i32
    scf.if %135 {
      %cst_109 = arith.constant 0.000000e+00 : f32
      %184 = vector.broadcast %cst_109 : f32 to vector<1x24x128xf32>
      %c0_110 = arith.constant 0 : index
      %c0_111 = arith.constant 0 : index
      %c0_112 = arith.constant 0 : index
      %185 = vector.load %arg21[%c0_110, %c0_111, %c0_112] : memref<1x24x128xf32, #tpu.memory_space<vmem>>, vector<1x24x128xf32>
      tpu.vector_store %arg21[%c0_110, %c0_111, %c0_112], %184 {strides = array<i32>} : memref<1x24x128xf32, #tpu.memory_space<vmem>>, vector<1x24x128xf32>,
    } else {
    }
    %cst_72 = arith.constant dense<0.000000e+00> : vector<3xf32>
    %136 = vector.multi_reduction <add>, %39, %cst_72 [1] : vector<3x128xf32> to vector<3xf32>
    %137 = vector.shape_cast %136 : vector<3xf32> to vector<3x1xf32>
    %c0_73 = arith.constant 0 : index
    %c0_74 = arith.constant 0 : index
    %c0_75 = arith.constant 0 : index
    %138 = vector.load %arg21[%c0_73, %c0_74, %c0_75] : memref<1x24x128xf32, #tpu.memory_space<vmem>>, vector<1x3x1xf32>
    %139 = vector.shape_cast %138 : vector<1x3x1xf32> to vector<3x1xf32>
    %140 = arith.addf %139, %137 : vector<3x1xf32>
    %c0_76 = arith.constant 0 : index
    %c0_77 = arith.constant 0 : index
    %c0_78 = arith.constant 0 : index
    %141 = vector.load %arg21[%c0_76, %c0_77, %c0_78] : memref<1x24x128xf32, #tpu.memory_space<vmem>>, vector<1x3x1xf32>
    %142 = vector.shape_cast %141 : vector<1x3x1xf32> to vector<3x1xf32>
    %143 = vector.shape_cast %140 : vector<3x1xf32> to vector<1x3x1xf32>
    tpu.vector_store %arg21[%c0_76, %c0_77, %c0_78], %143 {strides = array<i32>} : memref<1x24x128xf32, #tpu.memory_space<vmem>>, vector<1x3x1xf32>,
    %cst_79 = arith.constant dense<0.000000e+00> : vector<3xf32>
    %144 = vector.multi_reduction <add>, %90, %cst_79 [1] : vector<3x128xf32> to vector<3xf32>
    %145 = vector.shape_cast %144 : vector<3xf32> to vector<3x1xf32>
    %c0_80 = arith.constant 0 : index
    %c3 = arith.constant 3 : index
    %c0_81 = arith.constant 0 : index
    %146 = vector.load %arg21[%c0_80, %c3, %c0_81] : memref<1x24x128xf32, #tpu.memory_space<vmem>>, vector<1x3x1xf32>
    %147 = vector.shape_cast %146 : vector<1x3x1xf32> to vector<3x1xf32>
    %148 = arith.addf %147, %145 : vector<3x1xf32>
    %c0_82 = arith.constant 0 : index
    %c3_83 = arith.constant 3 : index
    %c0_84 = arith.constant 0 : index
    %149 = vector.load %arg21[%c0_82, %c3_83, %c0_84] : memref<1x24x128xf32, #tpu.memory_space<vmem>>, vector<1x3x1xf32>
    %150 = vector.shape_cast %149 : vector<1x3x1xf32> to vector<3x1xf32>
    %151 = vector.shape_cast %148 : vector<3x1xf32> to vector<1x3x1xf32>
    tpu.vector_store %arg21[%c0_82, %c3_83, %c0_84], %151 {strides = array<i32>} : memref<1x24x128xf32, #tpu.memory_space<vmem>>, vector<1x3x1xf32>,
    %cst_85 = arith.constant dense<0.000000e+00> : vector<3xf32>
    %152 = vector.multi_reduction <add>, %43, %cst_85 [1] : vector<3x128xf32> to vector<3xf32>
    %153 = vector.shape_cast %152 : vector<3xf32> to vector<3x1xf32>
    %c0_86 = arith.constant 0 : index
    %c6 = arith.constant 6 : index
    %c0_87 = arith.constant 0 : index
    %154 = vector.load %arg21[%c0_86, %c6, %c0_87] : memref<1x24x128xf32, #tpu.memory_space<vmem>>, vector<1x3x1xf32>
    %155 = vector.shape_cast %154 : vector<1x3x1xf32> to vector<3x1xf32>
    %156 = arith.addf %155, %153 : vector<3x1xf32>
    %c0_88 = arith.constant 0 : index
    %c6_89 = arith.constant 6 : index
    %c0_90 = arith.constant 0 : index
    %157 = vector.load %arg21[%c0_88, %c6_89, %c0_90] : memref<1x24x128xf32, #tpu.memory_space<vmem>>, vector<1x3x1xf32>
    %158 = vector.shape_cast %157 : vector<1x3x1xf32> to vector<3x1xf32>
    %159 = vector.shape_cast %156 : vector<3x1xf32> to vector<1x3x1xf32>
    tpu.vector_store %arg21[%c0_88, %c6_89, %c0_90], %159 {strides = array<i32>} : memref<1x24x128xf32, #tpu.memory_space<vmem>>, vector<1x3x1xf32>,
    %cst_91 = arith.constant dense<0.000000e+00> : vector<3xf32>
    %160 = vector.multi_reduction <add>, %41, %cst_91 [1] : vector<3x128xf32> to vector<3xf32>
    %161 = vector.shape_cast %160 : vector<3xf32> to vector<3x1xf32>
    %c0_92 = arith.constant 0 : index
    %c9 = arith.constant 9 : index
    %c0_93 = arith.constant 0 : index
    %162 = vector.load %arg21[%c0_92, %c9, %c0_93] : memref<1x24x128xf32, #tpu.memory_space<vmem>>, vector<1x3x1xf32>
    %163 = vector.shape_cast %162 : vector<1x3x1xf32> to vector<3x1xf32>
    %164 = arith.addf %163, %161 : vector<3x1xf32>
    %c0_94 = arith.constant 0 : index
    %c9_95 = arith.constant 9 : index
    %c0_96 = arith.constant 0 : index
    %165 = vector.load %arg21[%c0_94, %c9_95, %c0_96] : memref<1x24x128xf32, #tpu.memory_space<vmem>>, vector<1x3x1xf32>
    %166 = vector.shape_cast %165 : vector<1x3x1xf32> to vector<3x1xf32>
    %167 = vector.shape_cast %164 : vector<3x1xf32> to vector<1x3x1xf32>
    tpu.vector_store %arg21[%c0_94, %c9_95, %c0_96], %167 {strides = array<i32>} : memref<1x24x128xf32, #tpu.memory_space<vmem>>, vector<1x3x1xf32>,
    %cst_97 = arith.constant dense<0.000000e+00> : vector<3xf32>
    %168 = vector.multi_reduction <add>, %94, %cst_97 [1] : vector<3x128xf32> to vector<3xf32>
    %169 = vector.shape_cast %168 : vector<3xf32> to vector<3x1xf32>
    %c0_98 = arith.constant 0 : index
    %c12 = arith.constant 12 : index
    %c0_99 = arith.constant 0 : index
    %170 = vector.load %arg21[%c0_98, %c12, %c0_99] : memref<1x24x128xf32, #tpu.memory_space<vmem>>, vector<1x3x1xf32>
    %171 = vector.shape_cast %170 : vector<1x3x1xf32> to vector<3x1xf32>
    %172 = arith.addf %171, %169 : vector<3x1xf32>
    %c0_100 = arith.constant 0 : index
    %c12_101 = arith.constant 12 : index
    %c0_102 = arith.constant 0 : index
    %173 = vector.load %arg21[%c0_100, %c12_101, %c0_102] : memref<1x24x128xf32, #tpu.memory_space<vmem>>, vector<1x3x1xf32>
    %174 = vector.shape_cast %173 : vector<1x3x1xf32> to vector<3x1xf32>
    %175 = vector.shape_cast %172 : vector<3x1xf32> to vector<1x3x1xf32>
    tpu.vector_store %arg21[%c0_100, %c12_101, %c0_102], %175 {strides = array<i32>} : memref<1x24x128xf32, #tpu.memory_space<vmem>>, vector<1x3x1xf32>,
    %cst_103 = arith.constant dense<0.000000e+00> : vector<7xf32>
    %176 = vector.multi_reduction <add>, %34, %cst_103 [1] : vector<7x128xf32> to vector<7xf32>
    %177 = vector.shape_cast %176 : vector<7xf32> to vector<7x1xf32>
    %c0_104 = arith.constant 0 : index
    %c15 = arith.constant 15 : index
    %c0_105 = arith.constant 0 : index
    %178 = vector.load %arg21[%c0_104, %c15, %c0_105] : memref<1x24x128xf32, #tpu.memory_space<vmem>>, vector<1x7x1xf32>
    %179 = vector.shape_cast %178 : vector<1x7x1xf32> to vector<7x1xf32>
    %180 = arith.addf %179, %177 : vector<7x1xf32>
    %c0_106 = arith.constant 0 : index
    %c15_107 = arith.constant 15 : index
    %c0_108 = arith.constant 0 : index
    %181 = vector.load %arg21[%c0_106, %c15_107, %c0_108] : memref<1x24x128xf32, #tpu.memory_space<vmem>>, vector<1x7x1xf32>
    %182 = vector.shape_cast %181 : vector<1x7x1xf32> to vector<7x1xf32>
    %183 = vector.shape_cast %180 : vector<7x1xf32> to vector<1x7x1xf32>
    tpu.vector_store %arg21[%c0_106, %c15_107, %c0_108], %183 {strides = array<i32>} : memref<1x24x128xf32, #tpu.memory_space<vmem>>, vector<1x7x1xf32>,
    return
  }
  func.func @transform_0(%arg0: i32, %arg1: i32) -> (i32, i32, i32) {
    %c0_i32 = arith.constant 0 : i32
    %c0_i32_0 = arith.constant 0 : i32
    return %arg0, %c0_i32, %arg1 : i32, i32, i32
  }
  func.func @transform_1(%arg0: i32, %arg1: i32) -> (i32, i32, i32) {
    %c0_i32 = arith.constant 0 : i32
    %c0_i32_0 = arith.constant 0 : i32
    return %arg0, %c0_i32, %arg1 : i32, i32, i32
  }
  func.func @transform_2(%arg0: i32, %arg1: i32) -> (i32, i32, i32) {
    %c0_i32 = arith.constant 0 : i32
    %c0_i32_0 = arith.constant 0 : i32
    return %arg0, %c0_i32, %arg1 : i32, i32, i32
  }
  func.func @transform_3(%arg0: i32, %arg1: i32) -> (i32, i32, i32) {
    %c0_i32 = arith.constant 0 : i32
    %c0_i32_0 = arith.constant 0 : i32
    return %arg0, %c0_i32, %arg1 : i32, i32, i32
  }
  func.func @transform_4(%arg0: i32, %arg1: i32) -> (i32, i32, i32) {
    %c0_i32 = arith.constant 0 : i32
    %c0_i32_0 = arith.constant 0 : i32
    return %arg0, %c0_i32, %arg1 : i32, i32, i32
  }
  func.func @transform_5(%arg0: i32, %arg1: i32) -> (i32, i32, i32) {
    %c0_i32 = arith.constant 0 : i32
    %c0_i32_0 = arith.constant 0 : i32
    return %arg0, %c0_i32, %arg1 : i32, i32, i32
  }
  func.func @transform_6(%arg0: i32, %arg1: i32) -> (i32, i32) {
    %c0_i32 = arith.constant 0 : i32
    %c0_i32_0 = arith.constant 0 : i32
    %c0_i32_1 = arith.constant 0 : i32
    return %c0_i32, %c0_i32_0 : i32, i32
  }
  func.func @transform_7(%arg0: i32, %arg1: i32) -> (i32, i32) {
    %c0_i32 = arith.constant 0 : i32
    %c0_i32_0 = arith.constant 0 : i32
    %c0_i32_1 = arith.constant 0 : i32
    return %c0_i32, %c0_i32_0 : i32, i32
  }
  func.func @transform_8(%arg0: i32, %arg1: i32) -> (i32, i32) {
    %c0_i32 = arith.constant 0 : i32
    %c0_i32_0 = arith.constant 0 : i32
    %c0_i32_1 = arith.constant 0 : i32
    return %c0_i32, %c0_i32_0 : i32, i32
  }
  func.func @transform_9(%arg0: i32, %arg1: i32) -> (i32, i32) {
    %c0_i32 = arith.constant 0 : i32
    %c0_i32_0 = arith.constant 0 : i32
    %c0_i32_1 = arith.constant 0 : i32
    return %c0_i32, %c0_i32_0 : i32, i32
  }
  func.func @transform_10(%arg0: i32, %arg1: i32) -> (i32, i32) {
    %c0_i32 = arith.constant 0 : i32
    %c0_i32_0 = arith.constant 0 : i32
    %c0_i32_1 = arith.constant 0 : i32
    return %c0_i32, %c0_i32_0 : i32, i32
  }
  func.func @transform_11(%arg0: i32, %arg1: i32) -> (i32, i32, i32) {
    %c0_i32 = arith.constant 0 : i32
    %c0_i32_0 = arith.constant 0 : i32
    return %arg0, %c0_i32, %arg1 : i32, i32, i32
  }
  func.func @transform_12(%arg0: i32, %arg1: i32) -> (i32, i32, i32) {
    %c0_i32 = arith.constant 0 : i32
    %c0_i32_0 = arith.constant 0 : i32
    return %arg0, %c0_i32, %arg1 : i32, i32, i32
  }
  func.func @transform_13(%arg0: i32, %arg1: i32) -> (i32, i32, i32) {
    %c0_i32 = arith.constant 0 : i32
    %c0_i32_0 = arith.constant 0 : i32
    return %arg0, %c0_i32, %arg1 : i32, i32, i32
  }
  func.func @transform_14(%arg0: i32, %arg1: i32) -> (i32, i32, i32) {
    %c0_i32 = arith.constant 0 : i32
    %c0_i32_0 = arith.constant 0 : i32
    return %arg0, %c0_i32, %arg1 : i32, i32, i32
  }
  func.func @transform_15(%arg0: i32, %arg1: i32) -> (i32, i32, i32) {
    %c0_i32 = arith.constant 0 : i32
    %c0_i32_0 = arith.constant 0 : i32
    return %arg0, %c0_i32, %arg1 : i32, i32, i32
  }
  func.func @transform_16(%arg0: i32, %arg1: i32) -> (i32, i32, i32) {
    %c0_i32 = arith.constant 0 : i32
    %c0_i32_0 = arith.constant 0 : i32
    return %arg0, %c0_i32, %arg1 : i32, i32, i32
  }
  func.func @transform_17(%arg0: i32, %arg1: i32) -> (i32, i32, i32) {
    %c0_i32 = arith.constant 0 : i32
    %c0_i32_0 = arith.constant 0 : i32
    return %arg0, %c0_i32, %arg1 : i32, i32, i32
  }
  func.func @transform_18(%arg0: i32, %arg1: i32) -> (i32, i32, i32) {
    %c0_i32 = arith.constant 0 : i32
    %c0_i32_0 = arith.constant 0 : i32
    return %arg0, %c0_i32, %arg1 : i32, i32, i32
  }
  func.func @transform_19(%arg0: i32, %arg1: i32) -> (i32, i32, i32) {
    %c0_i32 = arith.constant 0 : i32
    %c0_i32_0 = arith.constant 0 : i32
    %c0_i32_1 = arith.constant 0 : i32
    return %arg0, %c0_i32, %c0_i32_0 : i32, i32, i32
  }
}

</mosaic_0001>

<llo_original>
// kernel: tpu_custom_call.1
$region0: #{tpu_custom_call.1}
  #allocation0 [shape = 'u32[]', space=smem, size = 0x4, offset = 0x4, fixed_abs, tag = 'smem constant byte address 0x4 - core index']
  #allocation1 [shape = 'u32[144,128]{1,0:T(1,128)}', space=vmem, size = 0x12000, scoped, tag = 'internal scratch']
  %s0 = inlined_call_operand.hbm [shape: f32[2,3,256], index: 0, kind: input, shape index: {}]
  %s1 = inlined_call_operand.hbm [shape: f32[2,3,256], index: 1, kind: input, shape index: {}]
  %s2 = inlined_call_operand.hbm [shape: f32[2,14,256], index: 2, kind: input, shape index: {}]
  %s3 = inlined_call_operand.hbm [shape: f32[2,14,256], index: 3, kind: input, shape index: {}]
  %s4 = inlined_call_operand.hbm [shape: f32[2,3,256], index: 4, kind: input, shape index: {}]
  %s5 = inlined_call_operand.hbm [shape: f32[2,3,256], index: 5, kind: input, shape index: {}]
  %s6 = inlined_call_operand.hbm [shape: f32[7,14], index: 6, kind: input, shape index: {}]
  %s7 = inlined_call_operand.hbm [shape: f32[7,16], index: 7, kind: input, shape index: {}]
  %s8 = inlined_call_operand.hbm [shape: f32[7,1], index: 8, kind: input, shape index: {}]
  %s9 = inlined_call_operand.hbm [shape: f32[8,22], index: 9, kind: input, shape index: {}]
  %s10 = inlined_call_operand.hbm [shape: f32[8,1], index: 10, kind: input, shape index: {}]
  %s11 = inlined_call_operand.hbm [shape: f32[2,7,256], index: 11, kind: output, shape index: {0}]
  %s12 = inlined_call_operand.hbm [shape: f32[2,1,256], index: 12, kind: output, shape index: {1}]
  %s13 = inlined_call_operand.hbm [shape: f32[2,7,256], index: 13, kind: output, shape index: {2}]
  %s14 = inlined_call_operand.hbm [shape: f32[2,3,256], index: 14, kind: output, shape index: {3}]
  %s15 = inlined_call_operand.hbm [shape: f32[2,3,256], index: 15, kind: output, shape index: {4}]
  %s16 = inlined_call_operand.hbm [shape: f32[2,3,256], index: 16, kind: output, shape index: {5}]
  %s17 = inlined_call_operand.hbm [shape: f32[2,3,256], index: 17, kind: output, shape index: {6}]
  %s18 = inlined_call_operand.hbm [shape: f32[2,2,256], index: 18, kind: output, shape index: {7}]
  %s19 = inlined_call_operand.hbm [shape: f32[2,24,128], index: 19, kind: output, shape index: {8}]
  %20 = xla_tuple %s11, %s12, %s13, %s14, %s15, %s16, %s17, %s18, %s19
  %s21 = sld [smem:[#allocation0]]
  $region189: #{tpu_custom_call.1} parent=0
    _
  %s23 = ssub.s32 1, %s21
  %s24 = scalar_select 0, %s23, %s21
  $region1: #{tpu_custom_call.1} parent=0
    #allocation2 [shape = 'u8[4096]{0}', space=vmem, size = 0x1000, scoped, tag = 'input window, operand 0']
    #allocation3 [shape = 's32[2]{0}', space=sflag, size = 0x8, scoped, tag = 'scoped memory for tpu_custom_call.1']
    #allocation4 [shape = 's32[2]{0}', space=sflag, size = 0x8, scoped, tag = 'scoped memory for tpu_custom_call.1']
    #allocation5 [shape = 'u8[4096]{0}', space=vmem, size = 0x1000, scoped, tag = 'input window, operand 1']
    #allocation6 [shape = 's32[2]{0}', space=sflag, size = 0x8, scoped, tag = 'scoped memory for tpu_custom_call.1']
    #allocation7 [shape = 'u8[16384]{0}', space=vmem, size = 0x4000, scoped, tag = 'input window, operand 2']
    #allocation8 [shape = 'u8[16384]{0}', space=vmem, size = 0x4000, scoped, tag = 'input window, operand 3']
    #allocation9 [shape = 's32[2]{0}', space=sflag, size = 0x8, scoped, tag = 'scoped memory for tpu_custom_call.1']
    #allocation10 [shape = 'u8[4096]{0}', space=vmem, size = 0x1000, scoped, tag = 'input window, operand 4']
    #allocation11 [shape = 'u8[4096]{0}', space=vmem, size = 0x1000, scoped, tag = 'input window, operand 5']
    #allocation12 [shape = 's32[2]{0}', space=sflag, size = 0x8, scoped, tag = 'scoped memory for tpu_custom_call.1']
    #allocation13 [shape = 'u8[4096]{0}', space=vmem, size = 0x1000, scoped, tag = 'input window, operand 6, single buffered']
    #allocation14 [shape = 'u8[4096]{0}', space=vmem, size = 0x1000, scoped, tag = 'input window, operand 7, single buffered']
    #allocation15 [shape = 's32[1]{0}', space=sflag, size = 0x4, scoped, tag = 'scoped memory for tpu_custom_call.1']
    #allocation16 [shape = 'u8[4096]{0}', space=vmem, size = 0x1000, scoped, tag = 'input window, operand 8, single buffered']
    #allocation17 [shape = 'u8[4096]{0}', space=vmem, size = 0x1000, scoped, tag = 'input window, operand 9, single buffered']
    #allocation18 [shape = 's32[1]{0}', space=sflag, size = 0x4, scoped, tag = 'scoped memory for tpu_custom_call.1']
    #allocation19 [shape = 'u8[4096]{0}', space=vmem, size = 0x1000, scoped, tag = 'input window, operand 10, single buffered']
    #allocation20 [shape = 'u8[8192]{0}', space=vmem, size = 0x2000, scoped, tag = 'output window, operand 0']
    #allocation21 [shape = 'u8[1024]{0}', space=vmem, size = 0x400, scoped, tag = 'output window, operand 1']
    #allocation22 [shape = 's32[2]{0}', space=sflag, size = 0x8, scoped, tag = 'scoped memory for tpu_custom_call.1']
    #allocation23 [shape = 'u8[8192]{0}', space=vmem, size = 0x2000, scoped, tag = 'output window, operand 2']
    #allocation24 [shape = 'u8[4096]{0}', space=vmem, size = 0x1000, scoped, tag = 'output window, operand 3']
    #allocation25 [shape = 's32[2]{0}', space=sflag, size = 0x8, scoped, tag = 'scoped memory for tpu_custom_call.1']
    #allocation26 [shape = 'u8[4096]{0}', space=vmem, size = 0x1000, scoped, tag = 'output window, operand 4']
    #allocation27 [shape = 'u8[4096]{0}', space=vmem, size = 0x1000, scoped, tag = 'output window, operand 5']
    #allocation28 [shape = 's32[2]{0}', space=sflag, size = 0x8, scoped, tag = 'scoped memory for tpu_custom_call.1']
    #allocation29 [shape = 'u8[4096]{0}', space=vmem, size = 0x1000, scoped, tag = 'output window, operand 6']
    #allocation30 [shape = 'u8[2048]{0}', space=vmem, size = 0x800, scoped, tag = 'output window, operand 7']
    #allocation31 [shape = 's32[2]{0}', space=sflag, size = 0x8, scoped, tag = 'scoped memory for tpu_custom_call.1']
    #allocation32 [shape = 'u8[24576]{0}', space=vmem, size = 0x6000, scoped, tag = 'output window, operand 8']
    %25 = vsyncpa [#allocation3], 0
    %s26 = scalar_lea.sflag [#allocation3], 1
    %27 = vsyncpa %s26, 0
    %28 = vsyncpa [#allocation6], 0
    %s29 = scalar_lea.sflag [#allocation6], 1
    %30 = vsyncpa %s29, 0
    %31 = vsyncpa [#allocation9], 0
    %s32 = scalar_lea.sflag [#allocation9], 1
    %33 = vsyncpa %s32, 0
    %34 = vsyncpa [#allocation12], 0
    %s35 = scalar_lea.sflag [#allocation12], 1
    %36 = vsyncpa %s35, 0
    %37 = vsyncpa [#allocation15], 0
    %38 = vsyncpa [#allocation18], 0
    %39 = vsyncpa [#allocation4], 0
    %s40 = scalar_lea.sflag [#allocation4], 1
    %41 = vsyncpa %s40, 0
    %42 = vsyncpa [#allocation22], 0
    %s43 = scalar_lea.sflag [#allocation22], 1
    %44 = vsyncpa %s43, 0
    %45 = vsyncpa [#allocation25], 0
    %s46 = scalar_lea.sflag [#allocation25], 1
    %47 = vsyncpa %s46, 0
    %48 = vsyncpa [#allocation28], 0
    %s49 = scalar_lea.sflag [#allocation28], 1
    %50 = vsyncpa %s49, 0
    %51 = vsyncpa [#allocation31], 0
    %s52 = scalar_lea.sflag [#allocation31], 1
    %53 = vsyncpa %s52, 0
    loop: start=0, step=1, limit=6
    $region2: #{tpu_custom_call.1} parent=1 // loop_pre_header
      _
    $region3: #{tpu_custom_call.1} parent=1 // loop_header
      %s55 = sphi 0, %s59
      %p56 = scmp.ge.s32.totalorder %s55, 6
      %s62 = sphi 0, %s74
      %s63 = sphi 0, %s70
      %s64 = sphi 0, %s62
      %s65 = sphi 0, %s63
      %s66 = sphi 0, %s64
      %s67 = sphi 0, %s65
      %s79 = sphi 0, %s81
      %s82 = sphi 0, %s79
      %s83 = sphi 0, %s82
      %s99 = sphi 0, %s83
      %s107 = sphi 0, %s109
      %s110 = sphi 0, %s107
      %s111 = sphi 0, %s110
      %s127 = sphi 0, %s111
      %s135 = sphi 0, %s137
      %s138 = sphi 0, %s135
      %s139 = sphi 0, %s138
      %s155 = sphi 0, %s139
      %s163 = sphi 0, %s165
      %s166 = sphi 0, %s163
      %s167 = sphi 0, %s166
      %s183 = sphi 0, %s167
      %s191 = sphi 0, %s193
      %s194 = sphi 0, %s191
      %s195 = sphi 0, %s194
      %s211 = sphi 0, %s195
      %s219 = sphi 0, %s221
      %s222 = sphi 0, %s219
      %s223 = sphi 0, %s222
      %s239 = sphi 0, %s223
      %s243 = sphi 0, %s243
      %s245 = sphi 0, %s243
      %s246 = sphi 0, %s245
      %s260 = sphi 0, %s246
      %s264 = sphi 0, %s264
      %s266 = sphi 0, %s264
      %s267 = sphi 0, %s266
      %s281 = sphi 0, %s267
      %s285 = sphi 0, %s285
      %s287 = sphi 0, %s285
      %s288 = sphi 0, %s287
      %s302 = sphi 0, %s288
      %s306 = sphi 0, %s306
      %s308 = sphi 0, %s306
      %s309 = sphi 0, %s308
      %s323 = sphi 0, %s309
      %s327 = sphi 0, %s327
      %s329 = sphi 0, %s327
      %s330 = sphi 0, %s329
      %s344 = sphi 0, %s330
      %s352 = sphi 0, %s354
      %s355 = sphi 0, %s352
      %s356 = sphi 0, %s355
      %s372 = sphi 0, %s356
      %s380 = sphi 0, %s382
      %s383 = sphi 0, %s380
      %s384 = sphi 0, %s383
      %s400 = sphi 0, %s384
      %s408 = sphi 0, %s410
      %s411 = sphi 0, %s408
      %s412 = sphi 0, %s411
      %s428 = sphi 0, %s412
      %s436 = sphi 0, %s438
      %s439 = sphi 0, %s436
      %s440 = sphi 0, %s439
      %s456 = sphi 0, %s440
      %s464 = sphi 0, %s466
      %s467 = sphi 0, %s464
      %s468 = sphi 0, %s467
      %s484 = sphi 0, %s468
      %s492 = sphi 0, %s494
      %s495 = sphi 0, %s492
      %s496 = sphi 0, %s495
      %s512 = sphi 0, %s496
      %s520 = sphi 0, %s522
      %s523 = sphi 0, %s520
      %s524 = sphi 0, %s523
      %s540 = sphi 0, %s524
      %s548 = sphi 0, %s550
      %s551 = sphi 0, %s548
      %s552 = sphi 0, %s551
      %s568 = sphi 0, %s552
      %s574 = sphi 0, %s576
      %s577 = sphi 0, %s574
      %s578 = sphi 0, %s577
      %s594 = sphi 0, %s578
    $region4: #{tpu_custom_call.1} parent=1 // loop_header_branch
      %58 = sbr.rel (%p56) target = $region8
    $region5: #{tpu_custom_call.1} parent=1 // loop_body
      %s60 = ssub.s32 %s55, 1
      %s61 = ssub.s32 %s55, 2
      %s68 = sadd.s32 1, %s63
      %p69 = scmp.ge.s32.totalorder %s68, 2
      %s70 = scalar_select %p69, 0, %s68
      %s71 = sadd.s32 1, %s62
      %s72 = scalar_select %p69, %s71, %s62
      %p73 = scmp.ge.s32.totalorder %s72, 2
      %s74 = scalar_select %p73, 0, %s72
      %s75 = ssub.s32 %s62, %s74
      %s76 = ssub.s32 %s63, %s70
      %s77 = sor.u32 %s75, %s76
      %p78 = scmp.eq.s32.totalorder %s77, 0
      %s80 = sadd.s32 %s79, 1
      %s81 = scalar_select %p78, %s79, %s80
      %p84 = pneg %p78
      %p85 = scmp.eq.s32.totalorder %s55, 3
      %p86 = por %p84, %p85
      %p87 = scmp.ne.s32.totalorder %s79, %s82
      %p88 = scmp.eq.s32.totalorder %s55, 0
      %p89 = por %p87, %p88
      %p90 = scmp.ne.s32.totalorder %s79, %s82
      %p91 = scmp.eq.s32.totalorder %s60, 3
      %p92 = por %p90, %p91
      %p93 = scmp.ne.s32.totalorder %s82, %s83
      %p94 = scmp.eq.s32.totalorder %s60, 0
      %p95 = por %p93, %p94
      %p96 = scmp.ne.s32.totalorder %s82, %s83
      %p97 = scmp.eq.s32.totalorder %s61, 3
      %p98 = por %p96, %p97
      %p100 = scmp.ne.s32.totalorder %s83, %s99
      %p101 = scmp.eq.s32.totalorder %s61, 0
      %p102 = por %p100, %p101
      %s103 = ssub.s32 %s62, %s74
      %s104 = ssub.s32 %s63, %s70
      %s105 = sor.u32 %s103, %s104
      %p106 = scmp.eq.s32.totalorder %s105, 0
      %s108 = sadd.s32 %s107, 1
      %s109 = scalar_select %p106, %s107, %s108
      %p112 = pneg %p106
      %p113 = scmp.eq.s32.totalorder %s55, 3
      %p114 = por %p112, %p113
      %p115 = scmp.ne.s32.totalorder %s107, %s110
      %p116 = scmp.eq.s32.totalorder %s55, 0
      %p117 = por %p115, %p116
      %p118 = scmp.ne.s32.totalorder %s107, %s110
      %p119 = scmp.eq.s32.totalorder %s60, 3
      %p120 = por %p118, %p119
      %p121 = scmp.ne.s32.totalorder %s110, %s111
      %p122 = scmp.eq.s32.totalorder %s60, 0
      %p123 = por %p121, %p122
      %p124 = scmp.ne.s32.totalorder %s110, %s111
      %p125 = scmp.eq.s32.totalorder %s61, 3
      %p126 = por %p124, %p125
      %p128 = scmp.ne.s32.totalorder %s111, %s127
      %p129 = scmp.eq.s32.totalorder %s61, 0
      %p130 = por %p128, %p129
      %s131 = ssub.s32 %s62, %s74
      %s132 = ssub.s32 %s63, %s70
      %s133 = sor.u32 %s131, %s132
      %p134 = scmp.eq.s32.totalorder %s133, 0
      %s136 = sadd.s32 %s135, 1
      %s137 = scalar_select %p134, %s135, %s136
      %p140 = pneg %p134
      %p141 = scmp.eq.s32.totalorder %s55, 3
      %p142 = por %p140, %p141
      %p143 = scmp.ne.s32.totalorder %s135, %s138
      %p144 = scmp.eq.s32.totalorder %s55, 0
      %p145 = por %p143, %p144
      %p146 = scmp.ne.s32.totalorder %s135, %s138
      %p147 = scmp.eq.s32.totalorder %s60, 3
      %p148 = por %p146, %p147
      %p149 = scmp.ne.s32.totalorder %s138, %s139
      %p150 = scmp.eq.s32.totalorder %s60, 0
      %p151 = por %p149, %p150
      %p152 = scmp.ne.s32.totalorder %s138, %s139
      %p153 = scmp.eq.s32.totalorder %s61, 3
      %p154 = por %p152, %p153
      %p156 = scmp.ne.s32.totalorder %s139, %s155
      %p157 = scmp.eq.s32.totalorder %s61, 0
      %p158 = por %p156, %p157
      %s159 = ssub.s32 %s62, %s74
      %s160 = ssub.s32 %s63, %s70
      %s161 = sor.u32 %s159, %s160
      %p162 = scmp.eq.s32.totalorder %s161, 0
      %s164 = sadd.s32 %s163, 1
      %s165 = scalar_select %p162, %s163, %s164
      %p168 = pneg %p162
      %p169 = scmp.eq.s32.totalorder %s55, 3
      %p170 = por %p168, %p169
      %p171 = scmp.ne.s32.totalorder %s163, %s166
      %p172 = scmp.eq.s32.totalorder %s55, 0
      %p173 = por %p171, %p172
      %p174 = scmp.ne.s32.totalorder %s163, %s166
      %p175 = scmp.eq.s32.totalorder %s60, 3
      %p176 = por %p174, %p175
      %p177 = scmp.ne.s32.totalorder %s166, %s167
      %p178 = scmp.eq.s32.totalorder %s60, 0
      %p179 = por %p177, %p178
      %p180 = scmp.ne.s32.totalorder %s166, %s167
      %p181 = scmp.eq.s32.totalorder %s61, 3
      %p182 = por %p180, %p181
      %p184 = scmp.ne.s32.totalorder %s167, %s183
      %p185 = scmp.eq.s32.totalorder %s61, 0
      %p186 = por %p184, %p185
      %s187 = ssub.s32 %s62, %s74
      %s188 = ssub.s32 %s63, %s70
      %s189 = sor.u32 %s187, %s188
      %p190 = scmp.eq.s32.totalorder %s189, 0
      %s192 = sadd.s32 %s191, 1
      %s193 = scalar_select %p190, %s191, %s192
      %p196 = pneg %p190
      %p197 = scmp.eq.s32.totalorder %s55, 3
      %p198 = por %p196, %p197
      %p199 = scmp.ne.s32.totalorder %s191, %s194
      %p200 = scmp.eq.s32.totalorder %s55, 0
      %p201 = por %p199, %p200
      %p202 = scmp.ne.s32.totalorder %s191, %s194
      %p203 = scmp.eq.s32.totalorder %s60, 3
      %p204 = por %p202, %p203
      %p205 = scmp.ne.s32.totalorder %s194, %s195
      %p206 = scmp.eq.s32.totalorder %s60, 0
      %p207 = por %p205, %p206
      %p208 = scmp.ne.s32.totalorder %s194, %s195
      %p209 = scmp.eq.s32.totalorder %s61, 3
      %p210 = por %p208, %p209
      %p212 = scmp.ne.s32.totalorder %s195, %s211
      %p213 = scmp.eq.s32.totalorder %s61, 0
      %p214 = por %p212, %p213
      %s215 = ssub.s32 %s62, %s74
      %s216 = ssub.s32 %s63, %s70
      %s217 = sor.u32 %s215, %s216
      %p218 = scmp.eq.s32.totalorder %s217, 0
      %s220 = sadd.s32 %s219, 1
      %s221 = scalar_select %p218, %s219, %s220
      %p224 = pneg %p218
      %p225 = scmp.eq.s32.totalorder %s55, 3
      %p226 = por %p224, %p225
      %p227 = scmp.ne.s32.totalorder %s219, %s222
      %p228 = scmp.eq.s32.totalorder %s55, 0
      %p229 = por %p227, %p228
      %p230 = scmp.ne.s32.totalorder %s219, %s222
      %p231 = scmp.eq.s32.totalorder %s60, 3
      %p232 = por %p230, %p231
      %p233 = scmp.ne.s32.totalorder %s222, %s223
      %p234 = scmp.eq.s32.totalorder %s60, 0
      %p235 = por %p233, %p234
      %p236 = scmp.ne.s32.totalorder %s222, %s223
      %p237 = scmp.eq.s32.totalorder %s61, 3
      %p238 = por %p236, %p237
      %p240 = scmp.ne.s32.totalorder %s223, %s239
      %p241 = scmp.eq.s32.totalorder %s61, 0
      %p242 = por %p240, %p241
      %s244 = sadd.s32 %s243, 1
      %p247 = scmp.eq.s32.totalorder %s55, 3
      %p248 = scmp.ne.s32.totalorder %s243, %s245
      %p249 = scmp.eq.s32.totalorder %s55, 0
      %p250 = por %p248, %p249
      %p251 = scmp.ne.s32.totalorder %s243, %s245
      %p252 = scmp.eq.s32.totalorder %s60, 3
      %p253 = por %p251, %p252
      %p254 = scmp.ne.s32.totalorder %s245, %s246
      %p255 = scmp.eq.s32.totalorder %s60, 0
      %p256 = por %p254, %p255
      %p257 = scmp.ne.s32.totalorder %s245, %s246
      %p258 = scmp.eq.s32.totalorder %s61, 3
      %p259 = por %p257, %p258
      %p261 = scmp.ne.s32.totalorder %s246, %s260
      %p262 = scmp.eq.s32.totalorder %s61, 0
      %p263 = por %p261, %p262
      %s265 = sadd.s32 %s264, 1
      %p268 = scmp.eq.s32.totalorder %s55, 3
      %p269 = scmp.ne.s32.totalorder %s264, %s266
      %p270 = scmp.eq.s32.totalorder %s55, 0
      %p271 = por %p269, %p270
      %p272 = scmp.ne.s32.totalorder %s264, %s266
      %p273 = scmp.eq.s32.totalorder %s60, 3
      %p274 = por %p272, %p273
      %p275 = scmp.ne.s32.totalorder %s266, %s267
      %p276 = scmp.eq.s32.totalorder %s60, 0
      %p277 = por %p275, %p276
      %p278 = scmp.ne.s32.totalorder %s266, %s267
      %p279 = scmp.eq.s32.totalorder %s61, 3
      %p280 = por %p278, %p279
      %p282 = scmp.ne.s32.totalorder %s267, %s281
      %p283 = scmp.eq.s32.totalorder %s61, 0
      %p284 = por %p282, %p283
      %s286 = sadd.s32 %s285, 1
      %p289 = scmp.eq.s32.totalorder %s55, 3
      %p290 = scmp.ne.s32.totalorder %s285, %s287
      %p291 = scmp.eq.s32.totalorder %s55, 0
      %p292 = por %p290, %p291
      %p293 = scmp.ne.s32.totalorder %s285, %s287
      %p294 = scmp.eq.s32.totalorder %s60, 3
      %p295 = por %p293, %p294
      %p296 = scmp.ne.s32.totalorder %s287, %s288
      %p297 = scmp.eq.s32.totalorder %s60, 0
      %p298 = por %p296, %p297
      %p299 = scmp.ne.s32.totalorder %s287, %s288
      %p300 = scmp.eq.s32.totalorder %s61, 3
      %p301 = por %p299, %p300
      %p303 = scmp.ne.s32.totalorder %s288, %s302
      %p304 = scmp.eq.s32.totalorder %s61, 0
      %p305 = por %p303, %p304
      %s307 = sadd.s32 %s306, 1
      %p310 = scmp.eq.s32.totalorder %s55, 3
      %p311 = scmp.ne.s32.totalorder %s306, %s308
      %p312 = scmp.eq.s32.totalorder %s55, 0
      %p313 = por %p311, %p312
      %p314 = scmp.ne.s32.totalorder %s306, %s308
      %p315 = scmp.eq.s32.totalorder %s60, 3
      %p316 = por %p314, %p315
      %p317 = scmp.ne.s32.totalorder %s308, %s309
      %p318 = scmp.eq.s32.totalorder %s60, 0
      %p319 = por %p317, %p318
      %p320 = scmp.ne.s32.totalorder %s308, %s309
      %p321 = scmp.eq.s32.totalorder %s61, 3
      %p322 = por %p320, %p321
      %p324 = scmp.ne.s32.totalorder %s309, %s323
      %p325 = scmp.eq.s32.totalorder %s61, 0
      %p326 = por %p324, %p325
      %s328 = sadd.s32 %s327, 1
      %p331 = scmp.eq.s32.totalorder %s55, 3
      %p332 = scmp.ne.s32.totalorder %s327, %s329
      %p333 = scmp.eq.s32.totalorder %s55, 0
      %p334 = por %p332, %p333
      %p335 = scmp.ne.s32.totalorder %s327, %s329
      %p336 = scmp.eq.s32.totalorder %s60, 3
      %p337 = por %p335, %p336
      %p338 = scmp.ne.s32.totalorder %s329, %s330
      %p339 = scmp.eq.s32.totalorder %s60, 0
      %p340 = por %p338, %p339
      %p341 = scmp.ne.s32.totalorder %s329, %s330
      %p342 = scmp.eq.s32.totalorder %s61, 3
      %p343 = por %p341, %p342
      %p345 = scmp.ne.s32.totalorder %s330, %s344
      %p346 = scmp.eq.s32.totalorder %s61, 0
      %p347 = por %p345, %p346
      %s348 = ssub.s32 %s62, %s74
      %s349 = ssub.s32 %s63, %s70
      %s350 = sor.u32 %s348, %s349
      %p351 = scmp.eq.s32.totalorder %s350, 0
      %s353 = sadd.s32 %s352, 1
      %s354 = scalar_select %p351, %s352, %s353
      %p357 = pneg %p351
      %p358 = scmp.eq.s32.totalorder %s55, 3
      %p359 = por %p357, %p358
      %p360 = scmp.ne.s32.totalorder %s352, %s355
      %p361 = scmp.eq.s32.totalorder %s55, 0
      %p362 = por %p360, %p361
      %p363 = scmp.ne.s32.totalorder %s352, %s355
      %p364 = scmp.eq.s32.totalorder %s60, 3
      %p365 = por %p363, %p364
      %p366 = scmp.ne.s32.totalorder %s355, %s356
      %p367 = scmp.eq.s32.totalorder %s60, 0
      %p368 = por %p366, %p367
      %p369 = scmp.ne.s32.totalorder %s355, %s356
      %p370 = scmp.eq.s32.totalorder %s61, 3
      %p371 = por %p369, %p370
      %p373 = scmp.ne.s32.totalorder %s356, %s372
      %p374 = scmp.eq.s32.totalorder %s61, 0
      %p375 = por %p373, %p374
      %s376 = ssub.s32 %s62, %s74
      %s377 = ssub.s32 %s63, %s70
      %s378 = sor.u32 %s376, %s377
      %p379 = scmp.eq.s32.totalorder %s378, 0
      %s381 = sadd.s32 %s380, 1
      %s382 = scalar_select %p379, %s380, %s381
      %p385 = pneg %p379
      %p386 = scmp.eq.s32.totalorder %s55, 3
      %p387 = por %p385, %p386
      %p388 = scmp.ne.s32.totalorder %s380, %s383
      %p389 = scmp.eq.s32.totalorder %s55, 0
      %p390 = por %p388, %p389
      %p391 = scmp.ne.s32.totalorder %s380, %s383
      %p392 = scmp.eq.s32.totalorder %s60, 3
      %p393 = por %p391, %p392
      %p394 = scmp.ne.s32.totalorder %s383, %s384
      %p395 = scmp.eq.s32.totalorder %s60, 0
      %p396 = por %p394, %p395
      %p397 = scmp.ne.s32.totalorder %s383, %s384
      %p398 = scmp.eq.s32.totalorder %s61, 3
      %p399 = por %p397, %p398
      %p401 = scmp.ne.s32.totalorder %s384, %s400
      %p402 = scmp.eq.s32.totalorder %s61, 0
      %p403 = por %p401, %p402
      %s404 = ssub.s32 %s62, %s74
      %s405 = ssub.s32 %s63, %s70
      %s406 = sor.u32 %s404, %s405
      %p407 = scmp.eq.s32.totalorder %s406, 0
      %s409 = sadd.s32 %s408, 1
      %s410 = scalar_select %p407, %s408, %s409
      %p413 = pneg %p407
      %p414 = scmp.eq.s32.totalorder %s55, 3
      %p415 = por %p413, %p414
      %p416 = scmp.ne.s32.totalorder %s408, %s411
      %p417 = scmp.eq.s32.totalorder %s55, 0
      %p418 = por %p416, %p417
      %p419 = scmp.ne.s32.totalorder %s408, %s411
      %p420 = scmp.eq.s32.totalorder %s60, 3
      %p421 = por %p419, %p420
      %p422 = scmp.ne.s32.totalorder %s411, %s412
      %p423 = scmp.eq.s32.totalorder %s60, 0
      %p424 = por %p422, %p423
      %p425 = scmp.ne.s32.totalorder %s411, %s412
      %p426 = scmp.eq.s32.totalorder %s61, 3
      %p427 = por %p425, %p426
      %p429 = scmp.ne.s32.totalorder %s412, %s428
      %p430 = scmp.eq.s32.totalorder %s61, 0
      %p431 = por %p429, %p430
      %s432 = ssub.s32 %s62, %s74
      %s433 = ssub.s32 %s63, %s70
      %s434 = sor.u32 %s432, %s433
      %p435 = scmp.eq.s32.totalorder %s434, 0
      %s437 = sadd.s32 %s436, 1
      %s438 = scalar_select %p435, %s436, %s437
      %p441 = pneg %p435
      %p442 = scmp.eq.s32.totalorder %s55, 3
      %p443 = por %p441, %p442
      %p444 = scmp.ne.s32.totalorder %s436, %s439
      %p445 = scmp.eq.s32.totalorder %s55, 0
      %p446 = por %p444, %p445
      %p447 = scmp.ne.s32.totalorder %s436, %s439
      %p448 = scmp.eq.s32.totalorder %s60, 3
      %p449 = por %p447, %p448
      %p450 = scmp.ne.s32.totalorder %s439, %s440
      %p451 = scmp.eq.s32.totalorder %s60, 0
      %p452 = por %p450, %p451
      %p453 = scmp.ne.s32.totalorder %s439, %s440
      %p454 = scmp.eq.s32.totalorder %s61, 3
      %p455 = por %p453, %p454
      %p457 = scmp.ne.s32.totalorder %s440, %s456
      %p458 = scmp.eq.s32.totalorder %s61, 0
      %p459 = por %p457, %p458
      %s460 = ssub.s32 %s62, %s74
      %s461 = ssub.s32 %s63, %s70
      %s462 = sor.u32 %s460, %s461
      %p463 = scmp.eq.s32.totalorder %s462, 0
      %s465 = sadd.s32 %s464, 1
      %s466 = scalar_select %p463, %s464, %s465
      %p469 = pneg %p463
      %p470 = scmp.eq.s32.totalorder %s55, 3
      %p471 = por %p469, %p470
      %p472 = scmp.ne.s32.totalorder %s464, %s467
      %p473 = scmp.eq.s32.totalorder %s55, 0
      %p474 = por %p472, %p473
      %p475 = scmp.ne.s32.totalorder %s464, %s467
      %p476 = scmp.eq.s32.totalorder %s60, 3
      %p477 = por %p475, %p476
      %p478 = scmp.ne.s32.totalorder %s467, %s468
      %p479 = scmp.eq.s32.totalorder %s60, 0
      %p480 = por %p478, %p479
      %p481 = scmp.ne.s32.totalorder %s467, %s468
      %p482 = scmp.eq.s32.totalorder %s61, 3
      %p483 = por %p481, %p482
      %p485 = scmp.ne.s32.totalorder %s468, %s484
      %p486 = scmp.eq.s32.totalorder %s61, 0
      %p487 = por %p485, %p486
      %s488 = ssub.s32 %s62, %s74
      %s489 = ssub.s32 %s63, %s70
      %s490 = sor.u32 %s488, %s489
      %p491 = scmp.eq.s32.totalorder %s490, 0
      %s493 = sadd.s32 %s492, 1
      %s494 = scalar_select %p491, %s492, %s493
      %p497 = pneg %p491
      %p498 = scmp.eq.s32.totalorder %s55, 3
      %p499 = por %p497, %p498
      %p500 = scmp.ne.s32.totalorder %s492, %s495
      %p501 = scmp.eq.s32.totalorder %s55, 0
      %p502 = por %p500, %p501
      %p503 = scmp.ne.s32.totalorder %s492, %s495
      %p504 = scmp.eq.s32.totalorder %s60, 3
      %p505 = por %p503, %p504
      %p506 = scmp.ne.s32.totalorder %s495, %s496
      %p507 = scmp.eq.s32.totalorder %s60, 0
      %p508 = por %p506, %p507
      %p509 = scmp.ne.s32.totalorder %s495, %s496
      %p510 = scmp.eq.s32.totalorder %s61, 3
      %p511 = por %p509, %p510
      %p513 = scmp.ne.s32.totalorder %s496, %s512
      %p514 = scmp.eq.s32.totalorder %s61, 0
      %p515 = por %p513, %p514
      %s516 = ssub.s32 %s62, %s74
      %s517 = ssub.s32 %s63, %s70
      %s518 = sor.u32 %s516, %s517
      %p519 = scmp.eq.s32.totalorder %s518, 0
      %s521 = sadd.s32 %s520, 1
      %s522 = scalar_select %p519, %s520, %s521
      %p525 = pneg %p519
      %p526 = scmp.eq.s32.totalorder %s55, 3
      %p527 = por %p525, %p526
      %p528 = scmp.ne.s32.totalorder %s520, %s523
      %p529 = scmp.eq.s32.totalorder %s55, 0
      %p530 = por %p528, %p529
      %p531 = scmp.ne.s32.totalorder %s520, %s523
      %p532 = scmp.eq.s32.totalorder %s60, 3
      %p533 = por %p531, %p532
      %p534 = scmp.ne.s32.totalorder %s523, %s524
      %p535 = scmp.eq.s32.totalorder %s60, 0
      %p536 = por %p534, %p535
      %p537 = scmp.ne.s32.totalorder %s523, %s524
      %p538 = scmp.eq.s32.totalorder %s61, 3
      %p539 = por %p537, %p538
      %p541 = scmp.ne.s32.totalorder %s524, %s540
      %p542 = scmp.eq.s32.totalorder %s61, 0
      %p543 = por %p541, %p542
      %s544 = ssub.s32 %s62, %s74
      %s545 = ssub.s32 %s63, %s70
      %s546 = sor.u32 %s544, %s545
      %p547 = scmp.eq.s32.totalorder %s546, 0
      %s549 = sadd.s32 %s548, 1
      %s550 = scalar_select %p547, %s548, %s549
      %p553 = pneg %p547
      %p554 = scmp.eq.s32.totalorder %s55, 3
      %p555 = por %p553, %p554
      %p556 = scmp.ne.s32.totalorder %s548, %s551
      %p557 = scmp.eq.s32.totalorder %s55, 0
      %p558 = por %p556, %p557
      %p559 = scmp.ne.s32.totalorder %s548, %s551
      %p560 = scmp.eq.s32.totalorder %s60, 3
      %p561 = por %p559, %p560
      %p562 = scmp.ne.s32.totalorder %s551, %s552
      %p563 = scmp.eq.s32.totalorder %s60, 0
      %p564 = por %p562, %p563
      %p565 = scmp.ne.s32.totalorder %s551, %s552
      %p566 = scmp.eq.s32.totalorder %s61, 3
      %p567 = por %p565, %p566
      %p569 = scmp.ne.s32.totalorder %s552, %s568
      %p570 = scmp.eq.s32.totalorder %s61, 0
      %p571 = por %p569, %p570
      %s572 = ssub.s32 %s62, %s74
      %p573 = scmp.eq.s32.totalorder %s572, 0
      %s575 = sadd.s32 %s574, 1
      %s576 = scalar_select %p573, %s574, %s575
      %p579 = pneg %p573
      %p580 = scmp.eq.s32.totalorder %s55, 3
      %p581 = por %p579, %p580
      %p582 = scmp.ne.s32.totalorder %s574, %s577
      %p583 = scmp.eq.s32.totalorder %s55, 0
      %p584 = por %p582, %p583
      %p585 = scmp.ne.s32.totalorder %s574, %s577
      %p586 = scmp.eq.s32.totalorder %s60, 3
      %p587 = por %p585, %p586
      %p588 = scmp.ne.s32.totalorder %s577, %s578
      %p589 = scmp.eq.s32.totalorder %s60, 0
      %p590 = por %p588, %p589
      %p591 = scmp.ne.s32.totalorder %s577, %s578
      %p592 = scmp.eq.s32.totalorder %s61, 3
      %p593 = por %p591, %p592
      %p595 = scmp.ne.s32.totalorder %s578, %s594
      %p596 = scmp.eq.s32.totalorder %s61, 0
      %p597 = por %p595, %p596
      %p598 = scmp.le.s32.totalorder 1, %s55
      %p599 = scmp.lt.s32.totalorder %s55, 5
      %p600 = pnand %p598, %p599
      %p601 = pneg %p600
      // Predicated region
      $region9: #{tpu_custom_call.1} parent=5 // pred_check
        _
      $region10: #{tpu_custom_call.1} parent=5 // pred_check_branch
        %603 = sbr.rel (%p600) target = $region12
      $region11: #{tpu_custom_call.1} parent=5 // pred_region
        %s604 = ssub.s32 %s55, 1
        // Predicated region
        $region13: #{tpu_custom_call.1} parent=11 // pred_check
          %p605 = pneg %p256
        $region14: #{tpu_custom_call.1} parent=11 // pred_check_branch
          %607 = sbr.rel (%p605) target = $region16
        $region15: #{tpu_custom_call.1} parent=11 // pred_region
          %s609 = ssub.s32 128, 128
          %610 = vsyncadd [#allocation12], %s609
          %s612 = sshll.u32 [#allocation13], 4
          %s613 = int_to_ptr.vmem [resolvable:$true] %s612
          %615 = dma.hbm_to_vmem [thread:$0]  %s6, 128, %s613, [#allocation12]
        $region16: #{tpu_custom_call.1} parent=11 // pred_fallthru
          _
        // Predicated region
        $region17: #{tpu_custom_call.1} parent=11 // pred_check
          %p616 = pneg %p277
        $region18: #{tpu_custom_call.1} parent=11 // pred_check_branch
          %618 = sbr.rel (%p616) target = $region20
        $region19: #{tpu_custom_call.1} parent=11 // pred_region
          %s620 = ssub.s32 128, 128
          %621 = vsyncadd [#allocation15], %s620
          %s623 = sshll.u32 [#allocation14], 4
          %s624 = int_to_ptr.vmem [resolvable:$true] %s623
          %626 = dma.hbm_to_vmem [thread:$0]  %s7, 128, %s624, [#allocation15]
        $region20: #{tpu_custom_call.1} parent=11 // pred_fallthru
          _
        // Predicated region
        $region21: #{tpu_custom_call.1} parent=11 // pred_check
          %p627 = pneg %p298
        $region22: #{tpu_custom_call.1} parent=11 // pred_check_branch
          %629 = sbr.rel (%p627) target = $region24
        $region23: #{tpu_custom_call.1} parent=11 // pred_region
          %s631 = ssub.s32 128, 128
          %632 = vsyncadd [#allocation15], %s631
          %s634 = sshll.u32 [#allocation16], 4
          %s635 = int_to_ptr.vmem [resolvable:$true] %s634
          %637 = dma.hbm_to_vmem [thread:$0]  %s8, 128, %s635, [#allocation15]
        $region24: #{tpu_custom_call.1} parent=11 // pred_fallthru
          _
        // Predicated region
        $region25: #{tpu_custom_call.1} parent=11 // pred_check
          %p638 = pneg %p319
        $region26: #{tpu_custom_call.1} parent=11 // pred_check_branch
          %640 = sbr.rel (%p638) target = $region28
        $region27: #{tpu_custom_call.1} parent=11 // pred_region
          %s642 = ssub.s32 128, 128
          %643 = vsyncadd [#allocation18], %s642
          %s645 = sshll.u32 [#allocation17], 4
          %s646 = int_to_ptr.vmem [resolvable:$true] %s645
          %648 = dma.hbm_to_vmem [thread:$0]  %s9, 128, %s646, [#allocation18]
        $region28: #{tpu_custom_call.1} parent=11 // pred_fallthru
          _
        // Predicated region
        $region29: #{tpu_custom_call.1} parent=11 // pred_check
          %p649 = pneg %p340
        $region30: #{tpu_custom_call.1} parent=11 // pred_check_branch
          %651 = sbr.rel (%p649) target = $region32
        $region31: #{tpu_custom_call.1} parent=11 // pred_region
          %s653 = ssub.s32 128, 128
          %654 = vsyncadd [#allocation18], %s653
          %s656 = sshll.u32 [#allocation19], 4
          %s657 = int_to_ptr.vmem [resolvable:$true] %s656
          %659 = dma.hbm_to_vmem [thread:$0]  %s10, 128, %s657, [#allocation18]
        $region32: #{tpu_custom_call.1} parent=11 // pred_fallthru
          _
      $region12: #{tpu_custom_call.1} parent=5 // pred_fallthru
        _
      %p660 = scmp.lt.s32.totalorder %s55, 4
      // Predicated region
      $region33: #{tpu_custom_call.1} parent=5 // pred_check
        %p661 = pneg %p660
      $region34: #{tpu_custom_call.1} parent=5 // pred_check_branch
        %663 = sbr.rel (%p661) target = $region36
      $region35: #{tpu_custom_call.1} parent=5 // pred_region
        // Predicated region
        $region37: #{tpu_custom_call.1} parent=35 // pred_check
          %p664 = pneg %p89
        $region38: #{tpu_custom_call.1} parent=35 // pred_check_branch
          %666 = sbr.rel (%p664) target = $region40
        $region39: #{tpu_custom_call.1} parent=35 // pred_region
          %s667 = sand.u32 %s79, 1
          %s668 = scalar_lea.sflag [#allocation3], %s667
          %s669 = sand.u32 %s79, 1
          %s670 = smul.addr %s669, 4
          %s671 = scalar_lea.vmem [#allocation2], %s670
          %s673 = ssub.s32 64, 64
          %674 = vsyncadd %s668, %s673
          %s675 = smul.addr %s62, 2
          %s676 = sadd.s32 %s63, %s675
          %s677 = smul.addr %s676, 64
          %s678 = scalar_lea.hbm %s0, %s677
          %s680 = sshll.u32 %s671, 4
          %s681 = int_to_ptr.vmem [resolvable:$true] %s680
          %683 = dma.hbm_to_vmem [thread:$0]  %s678, 64, %s681, %s668
        $region40: #{tpu_custom_call.1} parent=35 // pred_fallthru
          _
        // Predicated region
        $region41: #{tpu_custom_call.1} parent=35 // pred_check
          %p684 = pneg %p117
        $region42: #{tpu_custom_call.1} parent=35 // pred_check_branch
          %686 = sbr.rel (%p684) target = $region44
        $region43: #{tpu_custom_call.1} parent=35 // pred_region
          %s687 = sand.u32 %s55, 1
          %s688 = scalar_lea.sflag [#allocation6], %s687
          %s689 = sand.u32 %s107, 1
          %s690 = smul.addr %s689, 4
          %s691 = scalar_lea.vmem [#allocation5], %s690
          %s693 = ssub.s32 64, 64
          %694 = vsyncadd %s688, %s693
          %s695 = smul.addr %s62, 2
          %s696 = sadd.s32 %s63, %s695
          %s697 = smul.addr %s696, 64
          %s698 = scalar_lea.hbm %s1, %s697
          %s700 = sshll.u32 %s691, 4
          %s701 = int_to_ptr.vmem [resolvable:$true] %s700
          %703 = dma.hbm_to_vmem [thread:$0]  %s698, 64, %s701, %s688
        $region44: #{tpu_custom_call.1} parent=35 // pred_fallthru
          _
        // Predicated region
        $region45: #{tpu_custom_call.1} parent=35 // pred_check
          %p704 = pneg %p145
        $region46: #{tpu_custom_call.1} parent=35 // pred_check_branch
          %706 = sbr.rel (%p704) target = $region48
        $region47: #{tpu_custom_call.1} parent=35 // pred_region
          %s707 = sand.u32 %s55, 1
          %s708 = scalar_lea.sflag [#allocation6], %s707
          %s709 = sand.u32 %s135, 1
          %s710 = smul.addr %s709, 16
          %s711 = scalar_lea.vmem [#allocation7], %s710
          %s713 = ssub.s32 256, 256
          %714 = vsyncadd %s708, %s713
          %s715 = smul.addr %s62, 4
          %s716 = sadd.s32 %s63, %s715
          %s717 = smul.addr %s716, 128
          %s718 = scalar_lea.hbm %s2, %s717
          %s719 = sshll.u32 %s711, 4
          %s720 = int_to_ptr.vmem [resolvable:$true] %s719
          %725 = dma.hbm_to_vmem [thread:$0]  %s718, 256, %s720, %s708, 256, 128, 8
        $region48: #{tpu_custom_call.1} parent=35 // pred_fallthru
          _
        // Predicated region
        $region49: #{tpu_custom_call.1} parent=35 // pred_check
          %p726 = pneg %p173
        $region50: #{tpu_custom_call.1} parent=35 // pred_check_branch
          %728 = sbr.rel (%p726) target = $region52
        $region51: #{tpu_custom_call.1} parent=35 // pred_region
          %s729 = sand.u32 %s55, 1
          %s730 = scalar_lea.sflag [#allocation9], %s729
          %s731 = sand.u32 %s163, 1
          %s732 = smul.addr %s731, 16
          %s733 = scalar_lea.vmem [#allocation8], %s732
          %s735 = ssub.s32 256, 256
          %736 = vsyncadd %s730, %s735
          %s737 = smul.addr %s62, 4
          %s738 = sadd.s32 %s63, %s737
          %s739 = smul.addr %s738, 128
          %s740 = scalar_lea.hbm %s3, %s739
          %s741 = sshll.u32 %s733, 4
          %s742 = int_to_ptr.vmem [resolvable:$true] %s741
          %747 = dma.hbm_to_vmem [thread:$0]  %s740, 256, %s742, %s730, 256, 128, 8
        $region52: #{tpu_custom_call.1} parent=35 // pred_fallthru
          _
        // Predicated region
        $region53: #{tpu_custom_call.1} parent=35 // pred_check
          %p748 = pneg %p201
        $region54: #{tpu_custom_call.1} parent=35 // pred_check_branch
          %750 = sbr.rel (%p748) target = $region56
        $region55: #{tpu_custom_call.1} parent=35 // pred_region
          %s751 = sand.u32 %s55, 1
          %s752 = scalar_lea.sflag [#allocation9], %s751
          %s753 = sand.u32 %s191, 1
          %s754 = smul.addr %s753, 4
          %s755 = scalar_lea.vmem [#allocation10], %s754
          %s757 = ssub.s32 64, 64
          %758 = vsyncadd %s752, %s757
          %s759 = smul.addr %s62, 2
          %s760 = sadd.s32 %s63, %s759
          %s761 = smul.addr %s760, 64
          %s762 = scalar_lea.hbm %s4, %s761
          %s764 = sshll.u32 %s755, 4
          %s765 = int_to_ptr.vmem [resolvable:$true] %s764
          %767 = dma.hbm_to_vmem [thread:$0]  %s762, 64, %s765, %s752
        $region56: #{tpu_custom_call.1} parent=35 // pred_fallthru
          _
        // Predicated region
        $region57: #{tpu_custom_call.1} parent=35 // pred_check
          %p768 = pneg %p229
        $region58: #{tpu_custom_call.1} parent=35 // pred_check_branch
          %770 = sbr.rel (%p768) target = $region60
        $region59: #{tpu_custom_call.1} parent=35 // pred_region
          %s771 = sand.u32 %s55, 1
          %s772 = scalar_lea.sflag [#allocation12], %s771
          %s773 = sand.u32 %s219, 1
          %s774 = smul.addr %s773, 4
          %s775 = scalar_lea.vmem [#allocation11], %s774
          %s777 = ssub.s32 64, 64
          %778 = vsyncadd %s772, %s777
          %s779 = smul.addr %s62, 2
          %s780 = sadd.s32 %s63, %s779
          %s781 = smul.addr %s780, 64
          %s782 = scalar_lea.hbm %s5, %s781
          %s784 = sshll.u32 %s775, 4
          %s785 = int_to_ptr.vmem [resolvable:$true] %s784
          %787 = dma.hbm_to_vmem [thread:$0]  %s782, 64, %s785, %s772
        $region60: #{tpu_custom_call.1} parent=35 // pred_fallthru
          _
      $region36: #{tpu_custom_call.1} parent=5 // pred_fallthru
        _
      %p788 = scmp.le.s32.totalorder 1, %s55
      %p789 = scmp.lt.s32.totalorder %s55, 5
      %p790 = pnand %p788, %p789
      %p791 = pneg %p790
      // Predicated region
      $region61: #{tpu_custom_call.1} parent=5 // pred_check
        _
      $region62: #{tpu_custom_call.1} parent=5 // pred_check_branch
        %793 = sbr.rel (%p790) target = $region64
      $region63: #{tpu_custom_call.1} parent=5 // pred_region
        %s794 = ssub.s32 %s55, 1
        %s795 = sand.u32 %s82, 1
        %s796 = scalar_lea.sflag [#allocation3], %s795
        %s797 = sand.u32 %s82, 1
        %s798 = smul.addr %s797, 4
        %s799 = scalar_lea.vmem [#allocation2], %s798
        // Predicated region
        $region65: #{tpu_custom_call.1} parent=63 // pred_check
          %p800 = pneg %p95
        $region66: #{tpu_custom_call.1} parent=63 // pred_check_branch
          %802 = sbr.rel (%p800) target = $region68
        $region67: #{tpu_custom_call.1} parent=63 // pred_region
          %803 = dma.done %s796, 64
        $region68: #{tpu_custom_call.1} parent=63 // pred_fallthru
          _
        %s804 = sand.u32 %s60, 1
        %s805 = scalar_lea.sflag [#allocation6], %s804
        %s806 = sand.u32 %s110, 1
        %s807 = smul.addr %s806, 4
        %s808 = scalar_lea.vmem [#allocation5], %s807
        // Predicated region
        $region69: #{tpu_custom_call.1} parent=63 // pred_check
          %p809 = pneg %p123
        $region70: #{tpu_custom_call.1} parent=63 // pred_check_branch
          %811 = sbr.rel (%p809) target = $region72
        $region71: #{tpu_custom_call.1} parent=63 // pred_region
          %812 = dma.done %s805, 64
        $region72: #{tpu_custom_call.1} parent=63 // pred_fallthru
          _
        %s813 = sand.u32 %s60, 1
        %s814 = scalar_lea.sflag [#allocation6], %s813
        %s815 = sand.u32 %s138, 1
        %s816 = smul.addr %s815, 16
        %s817 = scalar_lea.vmem [#allocation7], %s816
        // Predicated region
        $region73: #{tpu_custom_call.1} parent=63 // pred_check
          %p818 = pneg %p151
        $region74: #{tpu_custom_call.1} parent=63 // pred_check_branch
          %820 = sbr.rel (%p818) target = $region76
        $region75: #{tpu_custom_call.1} parent=63 // pred_region
          %821 = dma.done %s814, 256
        $region76: #{tpu_custom_call.1} parent=63 // pred_fallthru
          _
        %s822 = sand.u32 %s60, 1
        %s823 = scalar_lea.sflag [#allocation9], %s822
        %s824 = sand.u32 %s166, 1
        %s825 = smul.addr %s824, 16
        %s826 = scalar_lea.vmem [#allocation8], %s825
        // Predicated region
        $region77: #{tpu_custom_call.1} parent=63 // pred_check
          %p827 = pneg %p179
        $region78: #{tpu_custom_call.1} parent=63 // pred_check_branch
          %829 = sbr.rel (%p827) target = $region80
        $region79: #{tpu_custom_call.1} parent=63 // pred_region
          %830 = dma.done %s823, 256
        $region80: #{tpu_custom_call.1} parent=63 // pred_fallthru
          _
        %s831 = sand.u32 %s60, 1
        %s832 = scalar_lea.sflag [#allocation9], %s831
        %s833 = sand.u32 %s194, 1
        %s834 = smul.addr %s833, 4
        %s835 = scalar_lea.vmem [#allocation10], %s834
        // Predicated region
        $region81: #{tpu_custom_call.1} parent=63 // pred_check
          %p836 = pneg %p207
        $region82: #{tpu_custom_call.1} parent=63 // pred_check_branch
          %838 = sbr.rel (%p836) target = $region84
        $region83: #{tpu_custom_call.1} parent=63 // pred_region
          %839 = dma.done %s832, 64
        $region84: #{tpu_custom_call.1} parent=63 // pred_fallthru
          _
        %s840 = sand.u32 %s60, 1
        %s841 = scalar_lea.sflag [#allocation12], %s840
        %s842 = sand.u32 %s222, 1
        %s843 = smul.addr %s842, 4
        %s844 = scalar_lea.vmem [#allocation11], %s843
        // Predicated region
        $region85: #{tpu_custom_call.1} parent=63 // pred_check
          %p845 = pneg %p235
        $region86: #{tpu_custom_call.1} parent=63 // pred_check_branch
          %847 = sbr.rel (%p845) target = $region88
        $region87: #{tpu_custom_call.1} parent=63 // pred_region
          %848 = dma.done %s841, 64
        $region88: #{tpu_custom_call.1} parent=63 // pred_fallthru
          _
        // Predicated region
        $region89: #{tpu_custom_call.1} parent=63 // pred_check
          %p849 = pneg %p256
        $region90: #{tpu_custom_call.1} parent=63 // pred_check_branch
          %851 = sbr.rel (%p849) target = $region92
        $region91: #{tpu_custom_call.1} parent=63 // pred_region
          %852 = dma.done [#allocation12], 128
        $region92: #{tpu_custom_call.1} parent=63 // pred_fallthru
          _
        // Predicated region
        $region93: #{tpu_custom_call.1} parent=63 // pred_check
          %p853 = pneg %p277
        $region94: #{tpu_custom_call.1} parent=63 // pred_check_branch
          %855 = sbr.rel (%p853) target = $region96
        $region95: #{tpu_custom_call.1} parent=63 // pred_region
          %856 = dma.done [#allocation15], 128
        $region96: #{tpu_custom_call.1} parent=63 // pred_fallthru
          _
        // Predicated region
        $region97: #{tpu_custom_call.1} parent=63 // pred_check
          %p857 = pneg %p298
        $region98: #{tpu_custom_call.1} parent=63 // pred_check_branch
          %859 = sbr.rel (%p857) target = $region100
        $region99: #{tpu_custom_call.1} parent=63 // pred_region
          %860 = dma.done [#allocation15], 128
        $region100: #{tpu_custom_call.1} parent=63 // pred_fallthru
          _
        // Predicated region
        $region101: #{tpu_custom_call.1} parent=63 // pred_check
          %p861 = pneg %p319
        $region102: #{tpu_custom_call.1} parent=63 // pred_check_branch
          %863 = sbr.rel (%p861) target = $region104
        $region103: #{tpu_custom_call.1} parent=63 // pred_region
          %864 = dma.done [#allocation18], 128
        $region104: #{tpu_custom_call.1} parent=63 // pred_fallthru
          _
        // Predicated region
        $region105: #{tpu_custom_call.1} parent=63 // pred_check
          %p865 = pneg %p340
        $region106: #{tpu_custom_call.1} parent=63 // pred_check_branch
          %867 = sbr.rel (%p865) target = $region108
        $region107: #{tpu_custom_call.1} parent=63 // pred_region
          %868 = dma.done [#allocation18], 128
        $region108: #{tpu_custom_call.1} parent=63 // pred_fallthru
          _
        %s869 = sand.u32 %s82, 1
        %s870 = scalar_lea.sflag [#allocation3], %s869
        %s871 = sand.u32 %s82, 1
        %s872 = smul.addr %s871, 4
        %s873 = scalar_lea.vmem [#allocation2], %s872
        %p874 = pneg %p95
        %p875 = pneg %p92
        %s876 = sand.u32 %s60, 1
        %s877 = scalar_lea.sflag [#allocation6], %s876
        %s878 = sand.u32 %s110, 1
        %s879 = smul.addr %s878, 4
        %s880 = scalar_lea.vmem [#allocation5], %s879
        %p881 = pneg %p123
        %p882 = pneg %p120
        %s883 = sand.u32 %s60, 1
        %s884 = scalar_lea.sflag [#allocation6], %s883
        %s885 = sand.u32 %s138, 1
        %s886 = smul.addr %s885, 16
        %s887 = scalar_lea.vmem [#allocation7], %s886
        %p888 = pneg %p151
        %p889 = pneg %p148
        %s890 = sand.u32 %s60, 1
        %s891 = scalar_lea.sflag [#allocation9], %s890
        %s892 = sand.u32 %s166, 1
        %s893 = smul.addr %s892, 16
        %s894 = scalar_lea.vmem [#allocation8], %s893
        %p895 = pneg %p179
        %p896 = pneg %p176
        %s897 = sand.u32 %s60, 1
        %s898 = scalar_lea.sflag [#allocation9], %s897
        %s899 = sand.u32 %s194, 1
        %s900 = smul.addr %s899, 4
        %s901 = scalar_lea.vmem [#allocation10], %s900
        %p902 = pneg %p207
        %p903 = pneg %p204
        %s904 = sand.u32 %s60, 1
        %s905 = scalar_lea.sflag [#allocation12], %s904
        %s906 = sand.u32 %s222, 1
        %s907 = smul.addr %s906, 4
        %s908 = scalar_lea.vmem [#allocation11], %s907
        %p909 = pneg %p235
        %p910 = pneg %p232
        %p911 = pneg %p256
        %p912 = pneg %p253
        %p913 = pneg %p277
        %p914 = pneg %p274
        %p915 = pneg %p298
        %p916 = pneg %p295
        %p917 = pneg %p319
        %p918 = pneg %p316
        %p919 = pneg %p340
        %p920 = pneg %p337
        %p921 = pneg %p368
        %p922 = pneg %p365
        %s923 = sand.u32 %s355, 1
        %s924 = scalar_lea.sflag [#allocation4], %s923
        %s925 = sand.u32 %s355, 1
        %s926 = smul.addr %s925, 8
        %s927 = scalar_lea.vmem [#allocation20], %s926
        %p928 = pneg %p396
        %p929 = pneg %p393
        %s930 = sand.u32 %s60, 1
        %s931 = scalar_lea.sflag [#allocation22], %s930
        %s932 = sand.u32 %s383, 1
        %s933 = scalar_lea.vmem [#allocation21], %s932
        %p934 = pneg %p424
        %p935 = pneg %p421
        %s936 = sand.u32 %s60, 1
        %s937 = scalar_lea.sflag [#allocation22], %s936
        %s938 = sand.u32 %s411, 1
        %s939 = smul.addr %s938, 8
        %s940 = scalar_lea.vmem [#allocation23], %s939
        %p941 = pneg %p452
        %p942 = pneg %p449
        %s943 = sand.u32 %s60, 1
        %s944 = scalar_lea.sflag [#allocation25], %s943
        %s945 = sand.u32 %s439, 1
        %s946 = smul.addr %s945, 4
        %s947 = scalar_lea.vmem [#allocation24], %s946
        %p948 = pneg %p480
        %p949 = pneg %p477
        %s950 = sand.u32 %s60, 1
        %s951 = scalar_lea.sflag [#allocation25], %s950
        %s952 = sand.u32 %s467, 1
        %s953 = smul.addr %s952, 4
        %s954 = scalar_lea.vmem [#allocation26], %s953
        %p955 = pneg %p508
        %p956 = pneg %p505
        %s957 = sand.u32 %s60, 1
        %s958 = scalar_lea.sflag [#allocation28], %s957
        %s959 = sand.u32 %s495, 1
        %s960 = smul.addr %s959, 4
        %s961 = scalar_lea.vmem [#allocation27], %s960
        %p962 = pneg %p536
        %p963 = pneg %p533
        %s964 = sand.u32 %s60, 1
        %s965 = scalar_lea.sflag [#allocation28], %s964
        %s966 = sand.u32 %s523, 1
        %s967 = smul.addr %s966, 4
        %s968 = scalar_lea.vmem [#allocation29], %s967
        %p969 = pneg %p564
        %p970 = pneg %p561
        %s971 = sand.u32 %s60, 1
        %s972 = scalar_lea.sflag [#allocation31], %s971
        %s973 = sand.u32 %s551, 1
        %s974 = smul.addr %s973, 2
        %s975 = scalar_lea.vmem [#allocation30], %s974
        %p976 = pneg %p590
        %p977 = pneg %p587
        %s978 = sand.u32 %s60, 1
        %s979 = scalar_lea.sflag [#allocation31], %s978
        %s980 = sand.u32 %s577, 1
        %s981 = smul.addr %s980, 24
        %s982 = scalar_lea.vmem [#allocation32], %s981
        %v983 = vld [vmem:[#allocation13] sm:$0x7f]
        %v984 = vld [vmem:[%s817] sm:$0xff]
        %v985 = vld [vmem:[%s817 + $0x8] sm:$0x3f]
        %vm986 = vcmask 1045504
        %v987 = vsel %vm986, %v985, -inf
        %v988 = vmax.f32 %v984, %v987
        %v989 = vrot.slane %v988, 4
        %v990 = vmax.f32 %v988, %v989
        %v991 = vrot.slane %v990, 2
        %v992 = vmax.f32 %v990, %v991
        %v993 = vrot.slane %v992, 1
        %v994 = vmax.f32 %v992, %v993
        %v995 = vlaneseq
        %v996 = vshrl.u32 %v995, 7
        %v997 = vadd.s32 %v996, 8
        %vm998 = vcmp.eq.f32.partialorder %v984, %v994
        %vm999 = vcmp.eq.f32.partialorder %v985, %v994
        %v1000 = vsel %vm998, %v996, 14
        %v1001 = vsel %vm999, %v997, 14
        %v1002 = vsel %vm986, %v1001, 2147483647
        %vm1003 = vcmp.lt.s32.totalorder %v1000, %v1002
        %v1004 = vsel %vm1003, %v1000, %v1002
        %v1005 = vrot.slane %v1004, 4
        %vm1006 = vcmp.lt.s32.totalorder %v1004, %v1005
        %v1007 = vsel %vm1006, %v1004, %v1005
        %v1008 = vrot.slane %v1007, 2
        %vm1009 = vcmp.lt.s32.totalorder %v1007, %v1008
        %v1010 = vsel %vm1009, %v1007, %v1008
        %v1011 = vrot.slane %v1010, 1
        %vm1012 = vcmp.lt.s32.totalorder %v1010, %v1011
        %v1013 = vsel %vm1012, %v1010, %v1011
        %vm1014 = vcmp.eq.s32.totalorder %v996, %v1013
        %vm1015 = vcmp.eq.s32.totalorder %v997, %v1013
        %v1016 = vsel %vm1014, 1, 0
        %v1017 = vsel %vm1015, 1, 0
        %v1018 = vcvt.s32.f32 %v1016
        %v1019 = vcvt.s32.f32 %v1017
        %vm1020 = vcmask 113664
        %v1022 = vsel %vm1020, %v983, 0
        %v1025 = vsel %vm986, %v1019, 0
        %1027 = vmatprep.subr.mxu0 0.0
        %1028 = vmatpush1.msra.mxu0 %v1018
        %1029 = vmatprep.subr.mxu0 0.0
        %1030 = vmatpush1.msra.mxu0 %v1025
        %1031 = vmatprep.subr.mxu0 0.0
        %1032 = vmatpush1.msra.mxu0 0.0
        %1033 = vmatprep.subr.mxu0 0.0
        %1034 = vmatpush1.msra.mxu0 0.0
        %1035 = vmatprep.subr.mxu0 0.0
        %1036 = vmatpush1.msra.mxu0 0.0
        %1037 = vmatprep.subr.mxu0 0.0
        %1038 = vmatpush1.msra.mxu0 0.0
        %1039 = vmatprep.subr.mxu0 0.0
        %1040 = vmatpush1.msra.mxu0 0.0
        %1041 = vmatprep.subr.mxu0 0.0
        %1042 = vmatpush1.msra.mxu0 0.0
        %1043 = vmatprep.subr.mxu0 0.0
        %1044 = vmatpush1.msra.mxu0 0.0
        %1045 = vmatprep.subr.mxu0 0.0
        %1046 = vmatpush1.msra.mxu0 0.0
        %1047 = vmatprep.subr.mxu0 0.0
        %1048 = vmatpush1.msra.mxu0 0.0
        %1049 = vmatprep.subr.mxu0 0.0
        %1050 = vmatpush1.msra.mxu0 0.0
        %1051 = vmatprep.subr.mxu0 0.0
        %1052 = vmatpush1.msra.mxu0 0.0
        %1053 = vmatprep.subr.mxu0 0.0
        %1054 = vmatpush1.msra.mxu0 0.0
        %1055 = vmatprep.subr.mxu0 0.0
        %1056 = vmatpush1.msra.mxu0 0.0
        %1057 = vmatprep.subr.mxu0 0.0
        %1058 = vmatpush1.msra.mxu0 0.0
        %1059 = vmatprep.subr.mxu0 0.0
        %1060 = vmatpush1.msra.mxu0 0.0
        %1061 = vmatprep.subr.mxu0 0.0
        %1062 = vmatpush1.msra.mxu0 0.0
        %1063 = vmatprep.subr.mxu0 0.0
        %1064 = vmatpush1.msra.mxu0 0.0
        %1065 = vmatprep.subr.mxu0 0.0
        %1066 = vmatpush1.msra.mxu0 0.0
        %1067 = vmatprep.subr.mxu0 0.0
        %1068 = vmatpush1.msra.mxu0 0.0
        %1069 = vmatprep.subr.mxu0 0.0
        %1070 = vmatpush1.msra.mxu0 0.0
        %1071 = vmatprep.subr.mxu0 0.0
        %1072 = vmatpush1.msra.mxu0 0.0
        %1073 = vmatprep.subr.mxu0 0.0
        %1074 = vmatpush1.msra.mxu0 0.0
        %1075 = vmatprep.subr.mxu0 0.0
        %1076 = vmatpush1.msra.mxu0 0.0
        %1077 = vmatprep.subr.mxu0 0.0
        %1078 = vmatpush1.msra.mxu0 0.0
        %1079 = vmatprep.subr.mxu0 0.0
        %1080 = vmatpush1.msra.mxu0 0.0
        %1081 = vmatprep.subr.mxu0 0.0
        %1082 = vmatpush1.msra.mxu0 0.0
        %1083 = vmatprep.subr.mxu0 0.0
        %1084 = vmatpush1.msra.mxu0 0.0
        %1085 = vmatprep.subr.mxu0 0.0
        %1086 = vmatpush1.msra.mxu0 0.0
        %1087 = vmatprep.subr.mxu0 0.0
        %1088 = vmatpush1.msra.mxu0 0.0
        %1089 = vmatprep.subr.mxu0 0.0
        %1090 = vmatpush1.msra.mxu0 0.0
        %1091 = vmatprep.mubr.f32.mxu0 0.0
        %1092 = vmatmul.mubr.f32.gmra.mrb[0].mxu0 %v1022
        %v1093 = vpop.f32.mrb[0].mxu0
        %v1094 = vadd.f32 0.0, %v1093
        %v1095 = vpop.f32.mrb[0].mxu0
        %1096 = vdwg.mxu0
        %v1097 = vld [vmem:[%s826] sm:$0xff]
        %v1098 = vld [vmem:[%s826 + $0x8] sm:$0x3f]
        %v1099 = vsel %vm986, %v1098, -inf
        %v1100 = vmax.f32 %v1097, %v1099
        %v1101 = vrot.slane %v1100, 4
        %v1102 = vmax.f32 %v1100, %v1101
        %v1103 = vrot.slane %v1102, 2
        %v1104 = vmax.f32 %v1102, %v1103
        %v1105 = vrot.slane %v1104, 1
        %v1106 = vmax.f32 %v1104, %v1105
        %vm1107 = vcmp.eq.f32.partialorder %v1097, %v1106
        %vm1108 = vcmp.eq.f32.partialorder %v1098, %v1106
        %v1109 = vsel %vm1107, %v996, 14
        %v1110 = vsel %vm1108, %v997, 14
        %v1111 = vsel %vm986, %v1110, 2147483647
        %vm1112 = vcmp.lt.s32.totalorder %v1109, %v1111
        %v1113 = vsel %vm1112, %v1109, %v1111
        %v1114 = vrot.slane %v1113, 4
        %vm1115 = vcmp.lt.s32.totalorder %v1113, %v1114
        %v1116 = vsel %vm1115, %v1113, %v1114
        %v1117 = vrot.slane %v1116, 2
        %vm1118 = vcmp.lt.s32.totalorder %v1116, %v1117
        %v1119 = vsel %vm1118, %v1116, %v1117
        %v1120 = vrot.slane %v1119, 1
        %vm1121 = vcmp.lt.s32.totalorder %v1119, %v1120
        %v1122 = vsel %vm1121, %v1119, %v1120
        %vm1123 = vcmp.eq.s32.totalorder %v996, %v1122
        %vm1124 = vcmp.eq.s32.totalorder %v997, %v1122
        %v1125 = vsel %vm1123, 1, 0
        %v1126 = vsel %vm1124, 1, 0
        %v1127 = vcvt.s32.f32 %v1125
        %v1128 = vcvt.s32.f32 %v1126
        %v1130 = vsel %vm986, %v1128, 0
        %1132 = vmatprep.subr.mxu0 0.0
        %1133 = vmatpush1.msra.mxu0 %v1127
        %1134 = vmatprep.subr.mxu0 0.0
        %1135 = vmatpush1.msra.mxu0 %v1130
        %1136 = vmatprep.subr.mxu0 0.0
        %1137 = vmatpush1.msra.mxu0 0.0
        %1138 = vmatprep.subr.mxu0 0.0
        %1139 = vmatpush1.msra.mxu0 0.0
        %1140 = vmatprep.subr.mxu0 0.0
        %1141 = vmatpush1.msra.mxu0 0.0
        %1142 = vmatprep.subr.mxu0 0.0
        %1143 = vmatpush1.msra.mxu0 0.0
        %1144 = vmatprep.subr.mxu0 0.0
        %1145 = vmatpush1.msra.mxu0 0.0
        %1146 = vmatprep.subr.mxu0 0.0
        %1147 = vmatpush1.msra.mxu0 0.0
        %1148 = vmatprep.subr.mxu0 0.0
        %1149 = vmatpush1.msra.mxu0 0.0
        %1150 = vmatprep.subr.mxu0 0.0
        %1151 = vmatpush1.msra.mxu0 0.0
        %1152 = vmatprep.subr.mxu0 0.0
        %1153 = vmatpush1.msra.mxu0 0.0
        %1154 = vmatprep.subr.mxu0 0.0
        %1155 = vmatpush1.msra.mxu0 0.0
        %1156 = vmatprep.subr.mxu0 0.0
        %1157 = vmatpush1.msra.mxu0 0.0
        %1158 = vmatprep.subr.mxu0 0.0
        %1159 = vmatpush1.msra.mxu0 0.0
        %1160 = vmatprep.subr.mxu0 0.0
        %1161 = vmatpush1.msra.mxu0 0.0
        %1162 = vmatprep.subr.mxu0 0.0
        %1163 = vmatpush1.msra.mxu0 0.0
        %1164 = vmatprep.subr.mxu0 0.0
        %1165 = vmatpush1.msra.mxu0 0.0
        %1166 = vmatprep.subr.mxu0 0.0
        %1167 = vmatpush1.msra.mxu0 0.0
        %1168 = vmatprep.subr.mxu0 0.0
        %1169 = vmatpush1.msra.mxu0 0.0
        %1170 = vmatprep.subr.mxu0 0.0
        %1171 = vmatpush1.msra.mxu0 0.0
        %1172 = vmatprep.subr.mxu0 0.0
        %1173 = vmatpush1.msra.mxu0 0.0
        %1174 = vmatprep.subr.mxu0 0.0
        %1175 = vmatpush1.msra.mxu0 0.0
        %1176 = vmatprep.subr.mxu0 0.0
        %1177 = vmatpush1.msra.mxu0 0.0
        %1178 = vmatprep.subr.mxu0 0.0
        %1179 = vmatpush1.msra.mxu0 0.0
        %1180 = vmatprep.subr.mxu0 0.0
        %1181 = vmatpush1.msra.mxu0 0.0
        %1182 = vmatprep.subr.mxu0 0.0
        %1183 = vmatpush1.msra.mxu0 0.0
        %1184 = vmatprep.subr.mxu0 0.0
        %1185 = vmatpush1.msra.mxu0 0.0
        %1186 = vmatprep.subr.mxu0 0.0
        %1187 = vmatpush1.msra.mxu0 0.0
        %1188 = vmatprep.subr.mxu0 0.0
        %1189 = vmatpush1.msra.mxu0 0.0
        %1190 = vmatprep.subr.mxu0 0.0
        %1191 = vmatpush1.msra.mxu0 0.0
        %1192 = vmatprep.subr.mxu0 0.0
        %1193 = vmatpush1.msra.mxu0 0.0
        %1194 = vmatprep.subr.mxu0 0.0
        %1195 = vmatpush1.msra.mxu0 0.0
        %1196 = vmatprep.mubr.f32.mxu0 0.0
        %1197 = vmatmul.mubr.f32.gmra.mrb[0].mxu0 %v1022
        %v1198 = vpop.f32.mrb[0].mxu0
        %v1199 = vadd.f32 0.0, %v1198
        %v1200 = vpop.f32.mrb[0].mxu0
        %1201 = vdwg.mxu0
        %1202 = vst [vmem:[%s940] sm:$0x7f] %v1199
        %v1203 = vld [vmem:[%s844] sm:$0x7]
        %v1204 = vld [vmem:[%s808] sm:$0x7]
        %v1205 = vld [vmem:[%s835] sm:$0x7]
        %v1206 = vld [vmem:[%s799] sm:$0x7]
        %v1207 = vld [vmem:[#allocation14] sm:$0x7f]
        %1209 = vrot.lane.b32.xlu0 %v1207, 125
        %v1210 = vpop.permute.xlu0 %1209
        %vm1211 = vcmask 23552
        %v1212 = vsel %vm1211, %v1210, 0
        %vm1214 = vcmask 1042432
        %v1216 = vsel %vm1214, %v1204, 0
        %1218 = vmatprep.subr.mxu0 0.0
        %1219 = vmatpush1.msra.mxu0 %v1216
        %1220 = vmatprep.subr.mxu0 0.0
        %1221 = vmatpush1.msra.mxu0 0.0
        %1222 = vmatprep.subr.mxu0 0.0
        %1223 = vmatpush1.msra.mxu0 0.0
        %1224 = vmatprep.subr.mxu0 0.0
        %1225 = vmatpush1.msra.mxu0 0.0
        %1226 = vmatprep.subr.mxu0 0.0
        %1227 = vmatpush1.msra.mxu0 0.0
        %1228 = vmatprep.subr.mxu0 0.0
        %1229 = vmatpush1.msra.mxu0 0.0
        %1230 = vmatprep.subr.mxu0 0.0
        %1231 = vmatpush1.msra.mxu0 0.0
        %1232 = vmatprep.subr.mxu0 0.0
        %1233 = vmatpush1.msra.mxu0 0.0
        %1234 = vmatprep.subr.mxu0 0.0
        %1235 = vmatpush1.msra.mxu0 0.0
        %1236 = vmatprep.subr.mxu0 0.0
        %1237 = vmatpush1.msra.mxu0 0.0
        %1238 = vmatprep.subr.mxu0 0.0
        %1239 = vmatpush1.msra.mxu0 0.0
        %1240 = vmatprep.subr.mxu0 0.0
        %1241 = vmatpush1.msra.mxu0 0.0
        %1242 = vmatprep.subr.mxu0 0.0
        %1243 = vmatpush1.msra.mxu0 0.0
        %1244 = vmatprep.subr.mxu0 0.0
        %1245 = vmatpush1.msra.mxu0 0.0
        %1246 = vmatprep.subr.mxu0 0.0
        %1247 = vmatpush1.msra.mxu0 0.0
        %1248 = vmatprep.subr.mxu0 0.0
        %1249 = vmatpush1.msra.mxu0 0.0
        %1250 = vmatprep.subr.mxu0 0.0
        %1251 = vmatpush1.msra.mxu0 0.0
        %1252 = vmatprep.subr.mxu0 0.0
        %1253 = vmatpush1.msra.mxu0 0.0
        %1254 = vmatprep.subr.mxu0 0.0
        %1255 = vmatpush1.msra.mxu0 0.0
        %1256 = vmatprep.subr.mxu0 0.0
        %1257 = vmatpush1.msra.mxu0 0.0
        %1258 = vmatprep.subr.mxu0 0.0
        %1259 = vmatpush1.msra.mxu0 0.0
        %1260 = vmatprep.subr.mxu0 0.0
        %1261 = vmatpush1.msra.mxu0 0.0
        %1262 = vmatprep.subr.mxu0 0.0
        %1263 = vmatpush1.msra.mxu0 0.0
        %1264 = vmatprep.subr.mxu0 0.0
        %1265 = vmatpush1.msra.mxu0 0.0
        %1266 = vmatprep.subr.mxu0 0.0
        %1267 = vmatpush1.msra.mxu0 0.0
        %1268 = vmatprep.subr.mxu0 0.0
        %1269 = vmatpush1.msra.mxu0 0.0
        %1270 = vmatprep.subr.mxu0 0.0
        %1271 = vmatpush1.msra.mxu0 0.0
        %1272 = vmatprep.subr.mxu0 0.0
        %1273 = vmatpush1.msra.mxu0 0.0
        %1274 = vmatprep.subr.mxu0 0.0
        %1275 = vmatpush1.msra.mxu0 0.0
        %1276 = vmatprep.subr.mxu0 0.0
        %1277 = vmatpush1.msra.mxu0 0.0
        %1278 = vmatprep.subr.mxu0 0.0
        %1279 = vmatpush1.msra.mxu0 0.0
        %1280 = vmatprep.subr.mxu0 0.0
        %1281 = vmatpush1.msra.mxu0 0.0
        %1282 = vmatprep.mubr.f32.mxu0 0.0
        %1283 = vmatmul.mubr.f32.gmra.mrb[0].mxu0 %v1212
        %v1284 = vpop.f32.mrb[0].mxu0
        %v1285 = vadd.f32 0.0, %v1284
        %v1286 = vpop.f32.mrb[0].mxu0
        %1287 = vdwg.mxu0
        %v1288 = vsel %vm1211, %v1207, 0
        %v1291 = vsel %vm1214, %v1203, 0
        %1293 = vmatprep.subr.mxu0 0.0
        %1294 = vmatpush1.msra.mxu0 %v1291
        %1295 = vmatprep.subr.mxu0 0.0
        %1296 = vmatpush1.msra.mxu0 0.0
        %1297 = vmatprep.subr.mxu0 0.0
        %1298 = vmatpush1.msra.mxu0 0.0
        %1299 = vmatprep.subr.mxu0 0.0
        %1300 = vmatpush1.msra.mxu0 0.0
        %1301 = vmatprep.subr.mxu0 0.0
        %1302 = vmatpush1.msra.mxu0 0.0
        %1303 = vmatprep.subr.mxu0 0.0
        %1304 = vmatpush1.msra.mxu0 0.0
        %1305 = vmatprep.subr.mxu0 0.0
        %1306 = vmatpush1.msra.mxu0 0.0
        %1307 = vmatprep.subr.mxu0 0.0
        %1308 = vmatpush1.msra.mxu0 0.0
        %1309 = vmatprep.subr.mxu0 0.0
        %1310 = vmatpush1.msra.mxu0 0.0
        %1311 = vmatprep.subr.mxu0 0.0
        %1312 = vmatpush1.msra.mxu0 0.0
        %1313 = vmatprep.subr.mxu0 0.0
        %1314 = vmatpush1.msra.mxu0 0.0
        %1315 = vmatprep.subr.mxu0 0.0
        %1316 = vmatpush1.msra.mxu0 0.0
        %1317 = vmatprep.subr.mxu0 0.0
        %1318 = vmatpush1.msra.mxu0 0.0
        %1319 = vmatprep.subr.mxu0 0.0
        %1320 = vmatpush1.msra.mxu0 0.0
        %1321 = vmatprep.subr.mxu0 0.0
        %1322 = vmatpush1.msra.mxu0 0.0
        %1323 = vmatprep.subr.mxu0 0.0
        %1324 = vmatpush1.msra.mxu0 0.0
        %1325 = vmatprep.subr.mxu0 0.0
        %1326 = vmatpush1.msra.mxu0 0.0
        %1327 = vmatprep.subr.mxu0 0.0
        %1328 = vmatpush1.msra.mxu0 0.0
        %1329 = vmatprep.subr.mxu0 0.0
        %1330 = vmatpush1.msra.mxu0 0.0
        %1331 = vmatprep.subr.mxu0 0.0
        %1332 = vmatpush1.msra.mxu0 0.0
        %1333 = vmatprep.subr.mxu0 0.0
        %1334 = vmatpush1.msra.mxu0 0.0
        %1335 = vmatprep.subr.mxu0 0.0
        %1336 = vmatpush1.msra.mxu0 0.0
        %1337 = vmatprep.subr.mxu0 0.0
        %1338 = vmatpush1.msra.mxu0 0.0
        %1339 = vmatprep.subr.mxu0 0.0
        %1340 = vmatpush1.msra.mxu0 0.0
        %1341 = vmatprep.subr.mxu0 0.0
        %1342 = vmatpush1.msra.mxu0 0.0
        %1343 = vmatprep.subr.mxu0 0.0
        %1344 = vmatpush1.msra.mxu0 0.0
        %1345 = vmatprep.subr.mxu0 0.0
        %1346 = vmatpush1.msra.mxu0 0.0
        %1347 = vmatprep.subr.mxu0 0.0
        %1348 = vmatpush1.msra.mxu0 0.0
        %1349 = vmatprep.subr.mxu0 0.0
        %1350 = vmatpush1.msra.mxu0 0.0
        %1351 = vmatprep.subr.mxu0 0.0
        %1352 = vmatpush1.msra.mxu0 0.0
        %1353 = vmatprep.subr.mxu0 0.0
        %1354 = vmatpush1.msra.mxu0 0.0
        %1355 = vmatprep.subr.mxu0 0.0
        %1356 = vmatpush1.msra.mxu0 0.0
        %1357 = vmatprep.mubr.f32.mxu0 0.0
        %1358 = vmatmul.mubr.f32.gmra.mrb[0].mxu0 %v1288
        %v1359 = vpop.f32.mrb[0].mxu0
        %v1360 = vadd.f32 %v1285, %v1359
        %v1361 = vpop.f32.mrb[0].mxu0
        %1362 = vdwg.mxu0
        %1363 = vrot.lane.b32.xlu0 %v1207, 122
        %v1364 = vpop.permute.xlu0 %1363
        %vm1365 = vcmask 56320
        %v1366 = vsel %vm1365, %v1364, 0
        %vm1368 = vcmask 1046528
        %v1370 = vsel %vm1368, %v1094, 0
        %1372 = vmatprep.subr.mxu0 0.0
        %1373 = vmatpush1.msra.mxu0 %v1370
        %1374 = vmatprep.subr.mxu0 0.0
        %1375 = vmatpush1.msra.mxu0 0.0
        %1376 = vmatprep.subr.mxu0 0.0
        %1377 = vmatpush1.msra.mxu0 0.0
        %1378 = vmatprep.subr.mxu0 0.0
        %1379 = vmatpush1.msra.mxu0 0.0
        %1380 = vmatprep.subr.mxu0 0.0
        %1381 = vmatpush1.msra.mxu0 0.0
        %1382 = vmatprep.subr.mxu0 0.0
        %1383 = vmatpush1.msra.mxu0 0.0
        %1384 = vmatprep.subr.mxu0 0.0
        %1385 = vmatpush1.msra.mxu0 0.0
        %1386 = vmatprep.subr.mxu0 0.0
        %1387 = vmatpush1.msra.mxu0 0.0
        %1388 = vmatprep.subr.mxu0 0.0
        %1389 = vmatpush1.msra.mxu0 0.0
        %1390 = vmatprep.subr.mxu0 0.0
        %1391 = vmatpush1.msra.mxu0 0.0
        %1392 = vmatprep.subr.mxu0 0.0
        %1393 = vmatpush1.msra.mxu0 0.0
        %1394 = vmatprep.subr.mxu0 0.0
        %1395 = vmatpush1.msra.mxu0 0.0
        %1396 = vmatprep.subr.mxu0 0.0
        %1397 = vmatpush1.msra.mxu0 0.0
        %1398 = vmatprep.subr.mxu0 0.0
        %1399 = vmatpush1.msra.mxu0 0.0
        %1400 = vmatprep.subr.mxu0 0.0
        %1401 = vmatpush1.msra.mxu0 0.0
        %1402 = vmatprep.subr.mxu0 0.0
        %1403 = vmatpush1.msra.mxu0 0.0
        %1404 = vmatprep.subr.mxu0 0.0
        %1405 = vmatpush1.msra.mxu0 0.0
        %1406 = vmatprep.subr.mxu0 0.0
        %1407 = vmatpush1.msra.mxu0 0.0
        %1408 = vmatprep.subr.mxu0 0.0
        %1409 = vmatpush1.msra.mxu0 0.0
        %1410 = vmatprep.subr.mxu0 0.0
        %1411 = vmatpush1.msra.mxu0 0.0
        %1412 = vmatprep.subr.mxu0 0.0
        %1413 = vmatpush1.msra.mxu0 0.0
        %1414 = vmatprep.subr.mxu0 0.0
        %1415 = vmatpush1.msra.mxu0 0.0
        %1416 = vmatprep.subr.mxu0 0.0
        %1417 = vmatpush1.msra.mxu0 0.0
        %1418 = vmatprep.subr.mxu0 0.0
        %1419 = vmatpush1.msra.mxu0 0.0
        %1420 = vmatprep.subr.mxu0 0.0
        %1421 = vmatpush1.msra.mxu0 0.0
        %1422 = vmatprep.subr.mxu0 0.0
        %1423 = vmatpush1.msra.mxu0 0.0
        %1424 = vmatprep.subr.mxu0 0.0
        %1425 = vmatpush1.msra.mxu0 0.0
        %1426 = vmatprep.subr.mxu0 0.0
        %1427 = vmatpush1.msra.mxu0 0.0
        %1428 = vmatprep.subr.mxu0 0.0
        %1429 = vmatpush1.msra.mxu0 0.0
        %1430 = vmatprep.subr.mxu0 0.0
        %1431 = vmatpush1.msra.mxu0 0.0
        %1432 = vmatprep.subr.mxu0 0.0
        %1433 = vmatpush1.msra.mxu0 0.0
        %1434 = vmatprep.subr.mxu0 0.0
        %1435 = vmatpush1.msra.mxu0 0.0
        %1436 = vmatprep.mubr.f32.mxu0 0.0
        %1437 = vmatmul.mubr.f32.gmra.mrb[0].mxu0 %v1366
        %v1438 = vpop.f32.mrb[0].mxu0
        %v1439 = vadd.f32 0.0, %v1438
        %v1440 = vpop.f32.mrb[0].mxu0
        %1441 = vdwg.mxu0
        %v1442 = vadd.f32 %v1360, %v1439
        %1443 = vrot.lane.b32.xlu0 %v1207, 115
        %v1444 = vpop.permute.xlu0 %1443
        %v1445 = vsel %vm1211, %v1444, 0
        %v1448 = vsel %vm1214, %v1205, 0
        %1450 = vmatprep.subr.mxu0 0.0
        %1451 = vmatpush1.msra.mxu0 %v1448
        %1452 = vmatprep.subr.mxu0 0.0
        %1453 = vmatpush1.msra.mxu0 0.0
        %1454 = vmatprep.subr.mxu0 0.0
        %1455 = vmatpush1.msra.mxu0 0.0
        %1456 = vmatprep.subr.mxu0 0.0
        %1457 = vmatpush1.msra.mxu0 0.0
        %1458 = vmatprep.subr.mxu0 0.0
        %1459 = vmatpush1.msra.mxu0 0.0
        %1460 = vmatprep.subr.mxu0 0.0
        %1461 = vmatpush1.msra.mxu0 0.0
        %1462 = vmatprep.subr.mxu0 0.0
        %1463 = vmatpush1.msra.mxu0 0.0
        %1464 = vmatprep.subr.mxu0 0.0
        %1465 = vmatpush1.msra.mxu0 0.0
        %1466 = vmatprep.subr.mxu0 0.0
        %1467 = vmatpush1.msra.mxu0 0.0
        %1468 = vmatprep.subr.mxu0 0.0
        %1469 = vmatpush1.msra.mxu0 0.0
        %1470 = vmatprep.subr.mxu0 0.0
        %1471 = vmatpush1.msra.mxu0 0.0
        %1472 = vmatprep.subr.mxu0 0.0
        %1473 = vmatpush1.msra.mxu0 0.0
        %1474 = vmatprep.subr.mxu0 0.0
        %1475 = vmatpush1.msra.mxu0 0.0
        %1476 = vmatprep.subr.mxu0 0.0
        %1477 = vmatpush1.msra.mxu0 0.0
        %1478 = vmatprep.subr.mxu0 0.0
        %1479 = vmatpush1.msra.mxu0 0.0
        %1480 = vmatprep.subr.mxu0 0.0
        %1481 = vmatpush1.msra.mxu0 0.0
        %1482 = vmatprep.subr.mxu0 0.0
        %1483 = vmatpush1.msra.mxu0 0.0
        %1484 = vmatprep.subr.mxu0 0.0
        %1485 = vmatpush1.msra.mxu0 0.0
        %1486 = vmatprep.subr.mxu0 0.0
        %1487 = vmatpush1.msra.mxu0 0.0
        %1488 = vmatprep.subr.mxu0 0.0
        %1489 = vmatpush1.msra.mxu0 0.0
        %1490 = vmatprep.subr.mxu0 0.0
        %1491 = vmatpush1.msra.mxu0 0.0
        %1492 = vmatprep.subr.mxu0 0.0
        %1493 = vmatpush1.msra.mxu0 0.0
        %1494 = vmatprep.subr.mxu0 0.0
        %1495 = vmatpush1.msra.mxu0 0.0
        %1496 = vmatprep.subr.mxu0 0.0
        %1497 = vmatpush1.msra.mxu0 0.0
        %1498 = vmatprep.subr.mxu0 0.0
        %1499 = vmatpush1.msra.mxu0 0.0
        %1500 = vmatprep.subr.mxu0 0.0
        %1501 = vmatpush1.msra.mxu0 0.0
        %1502 = vmatprep.subr.mxu0 0.0
        %1503 = vmatpush1.msra.mxu0 0.0
        %1504 = vmatprep.subr.mxu0 0.0
        %1505 = vmatpush1.msra.mxu0 0.0
        %1506 = vmatprep.subr.mxu0 0.0
        %1507 = vmatpush1.msra.mxu0 0.0
        %1508 = vmatprep.subr.mxu0 0.0
        %1509 = vmatpush1.msra.mxu0 0.0
        %1510 = vmatprep.subr.mxu0 0.0
        %1511 = vmatpush1.msra.mxu0 0.0
        %1512 = vmatprep.subr.mxu0 0.0
        %1513 = vmatpush1.msra.mxu0 0.0
        %1514 = vmatprep.mubr.f32.mxu0 0.0
        %1515 = vmatmul.mubr.f32.gmra.mrb[0].mxu0 %v1445
        %v1516 = vpop.f32.mrb[0].mxu0
        %v1517 = vadd.f32 0.0, %v1516
        %v1518 = vpop.f32.mrb[0].mxu0
        %1519 = vdwg.mxu0
        %v1520 = vadd.f32 %v1442, %v1517
        %v1521 = vld [vmem:[#allocation16] sm:$0x7f]
        %1523 = vset.pattern.permute.xlu0 0
        %1524 = vperm.xlu0 %1523, %v1521
        %v1525 = vpop.permute.xlu0 %1524
        %v1527 = vadd.f32 %v1520, %v1525
        %v1528 = vmul.f32 %v1527, %v1527
        %v1529 = vsel %vm1368, %v1528, 0.0
        %v1530 = vrot.slane %v1529, 4
        %v1531 = vadd.f32 %v1529, %v1530
        %v1532 = vrot.slane %v1531, 2
        %v1533 = vadd.f32 %v1531, %v1532
        %v1534 = vrot.slane %v1533, 1
        %v1535 = vadd.f32 %v1533, %v1534
        %v1536 = vmax.f32 %v1535, 1e-24
        %v1537 = vrsqrt.pop %v1536
        %v1538 = vmul.f32 %v1527, %v1537
        %1539 = vst [vmem:[%s927] sm:$0x7f] %v1538
        %v1540 = vsel %vm1368, %v1538, -inf
        %v1541 = vrot.slane %v1540, 4
        %v1542 = vmax.f32 %v1540, %v1541
        %v1543 = vrot.slane %v1542, 2
        %v1544 = vmax.f32 %v1542, %v1543
        %v1545 = vrot.slane %v1544, 1
        %v1546 = vmax.f32 %v1544, %v1545
        %vm1547 = vcmp.eq.f32.partialorder %v1538, %v1546
        %v1548 = vsel %vm1547, %v996, 7
        %v1549 = vsel %vm1368, %v1548, 2147483647
        %v1550 = vrot.slane %v1549, 4
        %vm1551 = vcmp.lt.s32.totalorder %v1549, %v1550
        %v1552 = vsel %vm1551, %v1549, %v1550
        %v1553 = vrot.slane %v1552, 2
        %vm1554 = vcmp.lt.s32.totalorder %v1552, %v1553
        %v1555 = vsel %vm1554, %v1552, %v1553
        %v1556 = vrot.slane %v1555, 1
        %vm1557 = vcmp.lt.s32.totalorder %v1555, %v1556
        %v1558 = vsel %vm1557, %v1555, %v1556
        %vm1559 = vcmp.eq.s32.totalorder %v1558, 2
        %v1560 = vsel %vm1559, 1, 0
        %v1561 = vcvt.s32.f32 %v1560
        %1562 = vst [vmem:[%s933] sm:$0x1] %v1561
        %v1563 = vlaneseq
        %v1564 = vshrl.u32 %v1563, 7
        %v1565 = vsub.s32 2, %v1564
        %v1566 = vrot.slane %v1199, %v1565
        %v1567 = vmul.f32 %v1206, %v1566
        %1568 = vst [vmem:[%s961] sm:$0x7] %v1567
        %v1570 = vrot.slane %v1199, 2
        %v1572 = vrot.slane %v1199, 1
        %vm1574 = vcmask 1040384
        %v1575 = vsel %vm1574, %v1570, %v1572
        %vm1576 = vcmask 1041408
        %v1577 = vsel %vm1576, %v1575, %v1199
        %1578 = vst [vmem:[%s968] sm:$0x7] %v1577
        %v1579 = vld [vmem:[#allocation17] sm:$0xff]
        %1581 = vrot.lane.b32.xlu0 %v1579, 125
        %v1582 = vpop.permute.xlu0 %1581
        %v1583 = vsel %vm1211, %v1582, 0
        %v1586 = vsel %vm1214, %v1567, 0
        %1588 = vmatprep.subr.mxu0 0.0
        %1589 = vmatpush1.msra.mxu0 %v1586
        %1590 = vmatprep.subr.mxu0 0.0
        %1591 = vmatpush1.msra.mxu0 0.0
        %1592 = vmatprep.subr.mxu0 0.0
        %1593 = vmatpush1.msra.mxu0 0.0
        %1594 = vmatprep.subr.mxu0 0.0
        %1595 = vmatpush1.msra.mxu0 0.0
        %1596 = vmatprep.subr.mxu0 0.0
        %1597 = vmatpush1.msra.mxu0 0.0
        %1598 = vmatprep.subr.mxu0 0.0
        %1599 = vmatpush1.msra.mxu0 0.0
        %1600 = vmatprep.subr.mxu0 0.0
        %1601 = vmatpush1.msra.mxu0 0.0
        %1602 = vmatprep.subr.mxu0 0.0
        %1603 = vmatpush1.msra.mxu0 0.0
        %1604 = vmatprep.subr.mxu0 0.0
        %1605 = vmatpush1.msra.mxu0 0.0
        %1606 = vmatprep.subr.mxu0 0.0
        %1607 = vmatpush1.msra.mxu0 0.0
        %1608 = vmatprep.subr.mxu0 0.0
        %1609 = vmatpush1.msra.mxu0 0.0
        %1610 = vmatprep.subr.mxu0 0.0
        %1611 = vmatpush1.msra.mxu0 0.0
        %1612 = vmatprep.subr.mxu0 0.0
        %1613 = vmatpush1.msra.mxu0 0.0
        %1614 = vmatprep.subr.mxu0 0.0
        %1615 = vmatpush1.msra.mxu0 0.0
        %1616 = vmatprep.subr.mxu0 0.0
        %1617 = vmatpush1.msra.mxu0 0.0
        %1618 = vmatprep.subr.mxu0 0.0
        %1619 = vmatpush1.msra.mxu0 0.0
        %1620 = vmatprep.subr.mxu0 0.0
        %1621 = vmatpush1.msra.mxu0 0.0
        %1622 = vmatprep.subr.mxu0 0.0
        %1623 = vmatpush1.msra.mxu0 0.0
        %1624 = vmatprep.subr.mxu0 0.0
        %1625 = vmatpush1.msra.mxu0 0.0
        %1626 = vmatprep.subr.mxu0 0.0
        %1627 = vmatpush1.msra.mxu0 0.0
        %1628 = vmatprep.subr.mxu0 0.0
        %1629 = vmatpush1.msra.mxu0 0.0
        %1630 = vmatprep.subr.mxu0 0.0
        %1631 = vmatpush1.msra.mxu0 0.0
        %1632 = vmatprep.subr.mxu0 0.0
        %1633 = vmatpush1.msra.mxu0 0.0
        %1634 = vmatprep.subr.mxu0 0.0
        %1635 = vmatpush1.msra.mxu0 0.0
        %1636 = vmatprep.subr.mxu0 0.0
        %1637 = vmatpush1.msra.mxu0 0.0
        %1638 = vmatprep.subr.mxu0 0.0
        %1639 = vmatpush1.msra.mxu0 0.0
        %1640 = vmatprep.subr.mxu0 0.0
        %1641 = vmatpush1.msra.mxu0 0.0
        %1642 = vmatprep.subr.mxu0 0.0
        %1643 = vmatpush1.msra.mxu0 0.0
        %1644 = vmatprep.subr.mxu0 0.0
        %1645 = vmatpush1.msra.mxu0 0.0
        %1646 = vmatprep.subr.mxu0 0.0
        %1647 = vmatpush1.msra.mxu0 0.0
        %1648 = vmatprep.subr.mxu0 0.0
        %1649 = vmatpush1.msra.mxu0 0.0
        %1650 = vmatprep.subr.mxu0 0.0
        %1651 = vmatpush1.msra.mxu0 0.0
        %1652 = vmatprep.mubr.f32.mxu0 0.0
        %1653 = vmatmul.mubr.f32.gmra.mrb[0].mxu0 %v1583
        %v1654 = vpop.f32.mrb[0].mxu0
        %v1655 = vadd.f32 0.0, %v1654
        %v1656 = vpop.f32.mrb[0].mxu0
        %1657 = vdwg.mxu0
        %v1658 = vsel %vm1211, %v1579, 0
        %1660 = vmatprep.subr.mxu0 0.0
        %1661 = vmatpush1.msra.mxu0 %v1291
        %1662 = vmatprep.subr.mxu0 0.0
        %1663 = vmatpush1.msra.mxu0 0.0
        %1664 = vmatprep.subr.mxu0 0.0
        %1665 = vmatpush1.msra.mxu0 0.0
        %1666 = vmatprep.subr.mxu0 0.0
        %1667 = vmatpush1.msra.mxu0 0.0
        %1668 = vmatprep.subr.mxu0 0.0
        %1669 = vmatpush1.msra.mxu0 0.0
        %1670 = vmatprep.subr.mxu0 0.0
        %1671 = vmatpush1.msra.mxu0 0.0
        %1672 = vmatprep.subr.mxu0 0.0
        %1673 = vmatpush1.msra.mxu0 0.0
        %1674 = vmatprep.subr.mxu0 0.0
        %1675 = vmatpush1.msra.mxu0 0.0
        %1676 = vmatprep.subr.mxu0 0.0
        %1677 = vmatpush1.msra.mxu0 0.0
        %1678 = vmatprep.subr.mxu0 0.0
        %1679 = vmatpush1.msra.mxu0 0.0
        %1680 = vmatprep.subr.mxu0 0.0
        %1681 = vmatpush1.msra.mxu0 0.0
        %1682 = vmatprep.subr.mxu0 0.0
        %1683 = vmatpush1.msra.mxu0 0.0
        %1684 = vmatprep.subr.mxu0 0.0
        %1685 = vmatpush1.msra.mxu0 0.0
        %1686 = vmatprep.subr.mxu0 0.0
        %1687 = vmatpush1.msra.mxu0 0.0
        %1688 = vmatprep.subr.mxu0 0.0
        %1689 = vmatpush1.msra.mxu0 0.0
        %1690 = vmatprep.subr.mxu0 0.0
        %1691 = vmatpush1.msra.mxu0 0.0
        %1692 = vmatprep.subr.mxu0 0.0
        %1693 = vmatpush1.msra.mxu0 0.0
        %1694 = vmatprep.subr.mxu0 0.0
        %1695 = vmatpush1.msra.mxu0 0.0
        %1696 = vmatprep.subr.mxu0 0.0
        %1697 = vmatpush1.msra.mxu0 0.0
        %1698 = vmatprep.subr.mxu0 0.0
        %1699 = vmatpush1.msra.mxu0 0.0
        %1700 = vmatprep.subr.mxu0 0.0
        %1701 = vmatpush1.msra.mxu0 0.0
        %1702 = vmatprep.subr.mxu0 0.0
        %1703 = vmatpush1.msra.mxu0 0.0
        %1704 = vmatprep.subr.mxu0 0.0
        %1705 = vmatpush1.msra.mxu0 0.0
        %1706 = vmatprep.subr.mxu0 0.0
        %1707 = vmatpush1.msra.mxu0 0.0
        %1708 = vmatprep.subr.mxu0 0.0
        %1709 = vmatpush1.msra.mxu0 0.0
        %1710 = vmatprep.subr.mxu0 0.0
        %1711 = vmatpush1.msra.mxu0 0.0
        %1712 = vmatprep.subr.mxu0 0.0
        %1713 = vmatpush1.msra.mxu0 0.0
        %1714 = vmatprep.subr.mxu0 0.0
        %1715 = vmatpush1.msra.mxu0 0.0
        %1716 = vmatprep.subr.mxu0 0.0
        %1717 = vmatpush1.msra.mxu0 0.0
        %1718 = vmatprep.subr.mxu0 0.0
        %1719 = vmatpush1.msra.mxu0 0.0
        %1720 = vmatprep.subr.mxu0 0.0
        %1721 = vmatpush1.msra.mxu0 0.0
        %1722 = vmatprep.subr.mxu0 0.0
        %1723 = vmatpush1.msra.mxu0 0.0
        %1724 = vmatprep.mubr.f32.mxu0 0.0
        %1725 = vmatmul.mubr.f32.gmra.mrb[0].mxu0 %v1658
        %v1726 = vpop.f32.mrb[0].mxu0
        %v1727 = vadd.f32 %v1655, %v1726
        %v1728 = vpop.f32.mrb[0].mxu0
        %1729 = vdwg.mxu0
        %1730 = vrot.lane.b32.xlu0 %v1579, 122
        %v1731 = vpop.permute.xlu0 %1730
        %v1732 = vsel %vm1211, %v1731, 0
        %1734 = vmatprep.subr.mxu0 0.0
        %1735 = vmatpush1.msra.mxu0 %v1448
        %1736 = vmatprep.subr.mxu0 0.0
        %1737 = vmatpush1.msra.mxu0 0.0
        %1738 = vmatprep.subr.mxu0 0.0
        %1739 = vmatpush1.msra.mxu0 0.0
        %1740 = vmatprep.subr.mxu0 0.0
        %1741 = vmatpush1.msra.mxu0 0.0
        %1742 = vmatprep.subr.mxu0 0.0
        %1743 = vmatpush1.msra.mxu0 0.0
        %1744 = vmatprep.subr.mxu0 0.0
        %1745 = vmatpush1.msra.mxu0 0.0
        %1746 = vmatprep.subr.mxu0 0.0
        %1747 = vmatpush1.msra.mxu0 0.0
        %1748 = vmatprep.subr.mxu0 0.0
        %1749 = vmatpush1.msra.mxu0 0.0
        %1750 = vmatprep.subr.mxu0 0.0
        %1751 = vmatpush1.msra.mxu0 0.0
        %1752 = vmatprep.subr.mxu0 0.0
        %1753 = vmatpush1.msra.mxu0 0.0
        %1754 = vmatprep.subr.mxu0 0.0
        %1755 = vmatpush1.msra.mxu0 0.0
        %1756 = vmatprep.subr.mxu0 0.0
        %1757 = vmatpush1.msra.mxu0 0.0
        %1758 = vmatprep.subr.mxu0 0.0
        %1759 = vmatpush1.msra.mxu0 0.0
        %1760 = vmatprep.subr.mxu0 0.0
        %1761 = vmatpush1.msra.mxu0 0.0
        %1762 = vmatprep.subr.mxu0 0.0
        %1763 = vmatpush1.msra.mxu0 0.0
        %1764 = vmatprep.subr.mxu0 0.0
        %1765 = vmatpush1.msra.mxu0 0.0
        %1766 = vmatprep.subr.mxu0 0.0
        %1767 = vmatpush1.msra.mxu0 0.0
        %1768 = vmatprep.subr.mxu0 0.0
        %1769 = vmatpush1.msra.mxu0 0.0
        %1770 = vmatprep.subr.mxu0 0.0
        %1771 = vmatpush1.msra.mxu0 0.0
        %1772 = vmatprep.subr.mxu0 0.0
        %1773 = vmatpush1.msra.mxu0 0.0
        %1774 = vmatprep.subr.mxu0 0.0
        %1775 = vmatpush1.msra.mxu0 0.0
        %1776 = vmatprep.subr.mxu0 0.0
        %1777 = vmatpush1.msra.mxu0 0.0
        %1778 = vmatprep.subr.mxu0 0.0
        %1779 = vmatpush1.msra.mxu0 0.0
        %1780 = vmatprep.subr.mxu0 0.0
        %1781 = vmatpush1.msra.mxu0 0.0
        %1782 = vmatprep.subr.mxu0 0.0
        %1783 = vmatpush1.msra.mxu0 0.0
        %1784 = vmatprep.subr.mxu0 0.0
        %1785 = vmatpush1.msra.mxu0 0.0
        %1786 = vmatprep.subr.mxu0 0.0
        %1787 = vmatpush1.msra.mxu0 0.0
        %1788 = vmatprep.subr.mxu0 0.0
        %1789 = vmatpush1.msra.mxu0 0.0
        %1790 = vmatprep.subr.mxu0 0.0
        %1791 = vmatpush1.msra.mxu0 0.0
        %1792 = vmatprep.subr.mxu0 0.0
        %1793 = vmatpush1.msra.mxu0 0.0
        %1794 = vmatprep.subr.mxu0 0.0
        %1795 = vmatpush1.msra.mxu0 0.0
        %1796 = vmatprep.subr.mxu0 0.0
        %1797 = vmatpush1.msra.mxu0 0.0
        %1798 = vmatprep.mubr.f32.mxu0 0.0
        %1799 = vmatmul.mubr.f32.gmra.mrb[0].mxu0 %v1732
        %v1800 = vpop.f32.mrb[0].mxu0
        %v1801 = vadd.f32 0.0, %v1800
        %v1802 = vpop.f32.mrb[0].mxu0
        %1803 = vdwg.mxu0
        %v1804 = vadd.f32 %v1727, %v1801
        %1805 = vrot.lane.b32.xlu0 %v1579, 119
        %v1806 = vpop.permute.xlu0 %1805
        %v1807 = vsel %vm1211, %v1806, 0
        %1809 = vmatprep.subr.mxu0 0.0
        %1810 = vmatpush1.msra.mxu0 %v1216
        %1811 = vmatprep.subr.mxu0 0.0
        %1812 = vmatpush1.msra.mxu0 0.0
        %1813 = vmatprep.subr.mxu0 0.0
        %1814 = vmatpush1.msra.mxu0 0.0
        %1815 = vmatprep.subr.mxu0 0.0
        %1816 = vmatpush1.msra.mxu0 0.0
        %1817 = vmatprep.subr.mxu0 0.0
        %1818 = vmatpush1.msra.mxu0 0.0
        %1819 = vmatprep.subr.mxu0 0.0
        %1820 = vmatpush1.msra.mxu0 0.0
        %1821 = vmatprep.subr.mxu0 0.0
        %1822 = vmatpush1.msra.mxu0 0.0
        %1823 = vmatprep.subr.mxu0 0.0
        %1824 = vmatpush1.msra.mxu0 0.0
        %1825 = vmatprep.subr.mxu0 0.0
        %1826 = vmatpush1.msra.mxu0 0.0
        %1827 = vmatprep.subr.mxu0 0.0
        %1828 = vmatpush1.msra.mxu0 0.0
        %1829 = vmatprep.subr.mxu0 0.0
        %1830 = vmatpush1.msra.mxu0 0.0
        %1831 = vmatprep.subr.mxu0 0.0
        %1832 = vmatpush1.msra.mxu0 0.0
        %1833 = vmatprep.subr.mxu0 0.0
        %1834 = vmatpush1.msra.mxu0 0.0
        %1835 = vmatprep.subr.mxu0 0.0
        %1836 = vmatpush1.msra.mxu0 0.0
        %1837 = vmatprep.subr.mxu0 0.0
        %1838 = vmatpush1.msra.mxu0 0.0
        %1839 = vmatprep.subr.mxu0 0.0
        %1840 = vmatpush1.msra.mxu0 0.0
        %1841 = vmatprep.subr.mxu0 0.0
        %1842 = vmatpush1.msra.mxu0 0.0
        %1843 = vmatprep.subr.mxu0 0.0
        %1844 = vmatpush1.msra.mxu0 0.0
        %1845 = vmatprep.subr.mxu0 0.0
        %1846 = vmatpush1.msra.mxu0 0.0
        %1847 = vmatprep.subr.mxu0 0.0
        %1848 = vmatpush1.msra.mxu0 0.0
        %1849 = vmatprep.subr.mxu0 0.0
        %1850 = vmatpush1.msra.mxu0 0.0
        %1851 = vmatprep.subr.mxu0 0.0
        %1852 = vmatpush1.msra.mxu0 0.0
        %1853 = vmatprep.subr.mxu0 0.0
        %1854 = vmatpush1.msra.mxu0 0.0
        %1855 = vmatprep.subr.mxu0 0.0
        %1856 = vmatpush1.msra.mxu0 0.0
        %1857 = vmatprep.subr.mxu0 0.0
        %1858 = vmatpush1.msra.mxu0 0.0
        %1859 = vmatprep.subr.mxu0 0.0
        %1860 = vmatpush1.msra.mxu0 0.0
        %1861 = vmatprep.subr.mxu0 0.0
        %1862 = vmatpush1.msra.mxu0 0.0
        %1863 = vmatprep.subr.mxu0 0.0
        %1864 = vmatpush1.msra.mxu0 0.0
        %1865 = vmatprep.subr.mxu0 0.0
        %1866 = vmatpush1.msra.mxu0 0.0
        %1867 = vmatprep.subr.mxu0 0.0
        %1868 = vmatpush1.msra.mxu0 0.0
        %1869 = vmatprep.subr.mxu0 0.0
        %1870 = vmatpush1.msra.mxu0 0.0
        %1871 = vmatprep.subr.mxu0 0.0
        %1872 = vmatpush1.msra.mxu0 0.0
        %1873 = vmatprep.mubr.f32.mxu0 0.0
        %1874 = vmatmul.mubr.f32.gmra.mrb[0].mxu0 %v1807
        %v1875 = vpop.f32.mrb[0].mxu0
        %v1876 = vadd.f32 0.0, %v1875
        %v1877 = vpop.f32.mrb[0].mxu0
        %1878 = vdwg.mxu0
        %v1879 = vadd.f32 %v1804, %v1876
        %1880 = vrot.lane.b32.xlu0 %v1579, 116
        %v1881 = vpop.permute.xlu0 %1880
        %v1882 = vsel %vm1211, %v1881, 0
        %v1885 = vsel %vm1214, %v1577, 0
        %1887 = vmatprep.subr.mxu0 0.0
        %1888 = vmatpush1.msra.mxu0 %v1885
        %1889 = vmatprep.subr.mxu0 0.0
        %1890 = vmatpush1.msra.mxu0 0.0
        %1891 = vmatprep.subr.mxu0 0.0
        %1892 = vmatpush1.msra.mxu0 0.0
        %1893 = vmatprep.subr.mxu0 0.0
        %1894 = vmatpush1.msra.mxu0 0.0
        %1895 = vmatprep.subr.mxu0 0.0
        %1896 = vmatpush1.msra.mxu0 0.0
        %1897 = vmatprep.subr.mxu0 0.0
        %1898 = vmatpush1.msra.mxu0 0.0
        %1899 = vmatprep.subr.mxu0 0.0
        %1900 = vmatpush1.msra.mxu0 0.0
        %1901 = vmatprep.subr.mxu0 0.0
        %1902 = vmatpush1.msra.mxu0 0.0
        %1903 = vmatprep.subr.mxu0 0.0
        %1904 = vmatpush1.msra.mxu0 0.0
        %1905 = vmatprep.subr.mxu0 0.0
        %1906 = vmatpush1.msra.mxu0 0.0
        %1907 = vmatprep.subr.mxu0 0.0
        %1908 = vmatpush1.msra.mxu0 0.0
        %1909 = vmatprep.subr.mxu0 0.0
        %1910 = vmatpush1.msra.mxu0 0.0
        %1911 = vmatprep.subr.mxu0 0.0
        %1912 = vmatpush1.msra.mxu0 0.0
        %1913 = vmatprep.subr.mxu0 0.0
        %1914 = vmatpush1.msra.mxu0 0.0
        %1915 = vmatprep.subr.mxu0 0.0
        %1916 = vmatpush1.msra.mxu0 0.0
        %1917 = vmatprep.subr.mxu0 0.0
        %1918 = vmatpush1.msra.mxu0 0.0
        %1919 = vmatprep.subr.mxu0 0.0
        %1920 = vmatpush1.msra.mxu0 0.0
        %1921 = vmatprep.subr.mxu0 0.0
        %1922 = vmatpush1.msra.mxu0 0.0
        %1923 = vmatprep.subr.mxu0 0.0
        %1924 = vmatpush1.msra.mxu0 0.0
        %1925 = vmatprep.subr.mxu0 0.0
        %1926 = vmatpush1.msra.mxu0 0.0
        %1927 = vmatprep.subr.mxu0 0.0
        %1928 = vmatpush1.msra.mxu0 0.0
        %1929 = vmatprep.subr.mxu0 0.0
        %1930 = vmatpush1.msra.mxu0 0.0
        %1931 = vmatprep.subr.mxu0 0.0
        %1932 = vmatpush1.msra.mxu0 0.0
        %1933 = vmatprep.subr.mxu0 0.0
        %1934 = vmatpush1.msra.mxu0 0.0
        %1935 = vmatprep.subr.mxu0 0.0
        %1936 = vmatpush1.msra.mxu0 0.0
        %1937 = vmatprep.subr.mxu0 0.0
        %1938 = vmatpush1.msra.mxu0 0.0
        %1939 = vmatprep.subr.mxu0 0.0
        %1940 = vmatpush1.msra.mxu0 0.0
        %1941 = vmatprep.subr.mxu0 0.0
        %1942 = vmatpush1.msra.mxu0 0.0
        %1943 = vmatprep.subr.mxu0 0.0
        %1944 = vmatpush1.msra.mxu0 0.0
        %1945 = vmatprep.subr.mxu0 0.0
        %1946 = vmatpush1.msra.mxu0 0.0
        %1947 = vmatprep.subr.mxu0 0.0
        %1948 = vmatpush1.msra.mxu0 0.0
        %1949 = vmatprep.subr.mxu0 0.0
        %1950 = vmatpush1.msra.mxu0 0.0
        %1951 = vmatprep.mubr.f32.mxu0 0.0
        %1952 = vmatmul.mubr.f32.gmra.mrb[0].mxu0 %v1882
        %v1953 = vpop.f32.mrb[0].mxu0
        %v1954 = vadd.f32 0.0, %v1953
        %v1955 = vpop.f32.mrb[0].mxu0
        %1956 = vdwg.mxu0
        %v1957 = vadd.f32 %v1879, %v1954
        %1958 = vrot.lane.b32.xlu0 %v1579, 113
        %v1959 = vpop.permute.xlu0 %1958
        %v1960 = vsel %vm1365, %v1959, 0
        %v1962 = vsel %vm1368, %v1199, 0
        %1964 = vmatprep.subr.mxu0 0.0
        %1965 = vmatpush1.msra.mxu0 %v1962
        %1966 = vmatprep.subr.mxu0 0.0
        %1967 = vmatpush1.msra.mxu0 0.0
        %1968 = vmatprep.subr.mxu0 0.0
        %1969 = vmatpush1.msra.mxu0 0.0
        %1970 = vmatprep.subr.mxu0 0.0
        %1971 = vmatpush1.msra.mxu0 0.0
        %1972 = vmatprep.subr.mxu0 0.0
        %1973 = vmatpush1.msra.mxu0 0.0
        %1974 = vmatprep.subr.mxu0 0.0
        %1975 = vmatpush1.msra.mxu0 0.0
        %1976 = vmatprep.subr.mxu0 0.0
        %1977 = vmatpush1.msra.mxu0 0.0
        %1978 = vmatprep.subr.mxu0 0.0
        %1979 = vmatpush1.msra.mxu0 0.0
        %1980 = vmatprep.subr.mxu0 0.0
        %1981 = vmatpush1.msra.mxu0 0.0
        %1982 = vmatprep.subr.mxu0 0.0
        %1983 = vmatpush1.msra.mxu0 0.0
        %1984 = vmatprep.subr.mxu0 0.0
        %1985 = vmatpush1.msra.mxu0 0.0
        %1986 = vmatprep.subr.mxu0 0.0
        %1987 = vmatpush1.msra.mxu0 0.0
        %1988 = vmatprep.subr.mxu0 0.0
        %1989 = vmatpush1.msra.mxu0 0.0
        %1990 = vmatprep.subr.mxu0 0.0
        %1991 = vmatpush1.msra.mxu0 0.0
        %1992 = vmatprep.subr.mxu0 0.0
        %1993 = vmatpush1.msra.mxu0 0.0
        %1994 = vmatprep.subr.mxu0 0.0
        %1995 = vmatpush1.msra.mxu0 0.0
        %1996 = vmatprep.subr.mxu0 0.0
        %1997 = vmatpush1.msra.mxu0 0.0
        %1998 = vmatprep.subr.mxu0 0.0
        %1999 = vmatpush1.msra.mxu0 0.0
        %2000 = vmatprep.subr.mxu0 0.0
        %2001 = vmatpush1.msra.mxu0 0.0
        %2002 = vmatprep.subr.mxu0 0.0
        %2003 = vmatpush1.msra.mxu0 0.0
        %2004 = vmatprep.subr.mxu0 0.0
        %2005 = vmatpush1.msra.mxu0 0.0
        %2006 = vmatprep.subr.mxu0 0.0
        %2007 = vmatpush1.msra.mxu0 0.0
        %2008 = vmatprep.subr.mxu0 0.0
        %2009 = vmatpush1.msra.mxu0 0.0
        %2010 = vmatprep.subr.mxu0 0.0
        %2011 = vmatpush1.msra.mxu0 0.0
        %2012 = vmatprep.subr.mxu0 0.0
        %2013 = vmatpush1.msra.mxu0 0.0
        %2014 = vmatprep.subr.mxu0 0.0
        %2015 = vmatpush1.msra.mxu0 0.0
        %2016 = vmatprep.subr.mxu0 0.0
        %2017 = vmatpush1.msra.mxu0 0.0
        %2018 = vmatprep.subr.mxu0 0.0
        %2019 = vmatpush1.msra.mxu0 0.0
        %2020 = vmatprep.subr.mxu0 0.0
        %2021 = vmatpush1.msra.mxu0 0.0
        %2022 = vmatprep.subr.mxu0 0.0
        %2023 = vmatpush1.msra.mxu0 0.0
        %2024 = vmatprep.subr.mxu0 0.0
        %2025 = vmatpush1.msra.mxu0 0.0
        %2026 = vmatprep.subr.mxu0 0.0
        %2027 = vmatpush1.msra.mxu0 0.0
        %2028 = vmatprep.mubr.f32.mxu0 0.0
        %2029 = vmatmul.mubr.f32.gmra.mrb[0].mxu0 %v1960
        %v2030 = vpop.f32.mrb[0].mxu0
        %v2031 = vadd.f32 0.0, %v2030
        %v2032 = vpop.f32.mrb[0].mxu0
        %2033 = vdwg.mxu0
        %v2034 = vadd.f32 %v1957, %v2031
        %v2035 = vld [vmem:[#allocation19] sm:$0xff]
        %2037 = vset.pattern.permute.xlu0 0
        %2038 = vperm.xlu0 %2037, %v2035
        %v2039 = vpop.permute.xlu0 %2038
        %v2041 = vadd.f32 %v2034, %v2039
        %v2042 = vtanh.pop %v2041
        %2043 = vst [vmem:[%s947] sm:$0x7] %v2042
        %2044 = vst [vmem:[%s954 - $0x3] sm:$0x38] %v2042
        %2045 = vst [vmem:[%s975 - $0x6] sm:$0xc0] %v2041
        %p2046 = scmp.eq.s32.totalorder %s65, 0
        // Predicated region
        $region109: #{tpu_custom_call.1} parent=63 // pred_check
          %p2047 = pneg %p2046
        $region110: #{tpu_custom_call.1} parent=63 // pred_check_branch
          %2049 = sbr.rel (%p2047) target = $region112
        $region111: #{tpu_custom_call.1} parent=63 // pred_region
          %2050 = vst [vmem:[%s982] sm:$0xff] 0.0
          %2051 = vst [vmem:[%s982 + $0x8] sm:$0xff] 0.0
          %2052 = vst [vmem:[%s982 + $0x10] sm:$0xff] 0.0
        $region112: #{tpu_custom_call.1} parent=63 // pred_fallthru
          _
        %v2053 = vsel %vm1214, %v1203, 0.0
        %2054 = vadd.xlane.f32.xlu0 %v2053
        %v2055 = vpop.xlane.xlu0 %2054
        %v2056 = vld [vmem:[%s982] sm:$0x7]
        %v2057 = vadd.f32 %v2056, %v2055
        %vm2058 = vcmask 2048
        %2059 = vst.msk [vmem:[%s982] sm:$0x7] %vm2058, %v2057
        %v2060 = vsel %vm1214, %v1567, 0.0
        %2061 = vadd.xlane.f32.xlu0 %v2060
        %v2062 = vpop.xlane.xlu0 %2061
        %v2063 = vld [vmem:[%s982 + $0x3] sm:$0x7]
        %v2064 = vadd.f32 %v2063, %v2062
        %2065 = vst.msk [vmem:[%s982 + $0x3] sm:$0x7] %vm2058, %v2064
        %v2066 = vsel %vm1214, %v1205, 0.0
        %2067 = vadd.xlane.f32.xlu0 %v2066
        %v2068 = vpop.xlane.xlu0 %2067
        %v2069 = vld [vmem:[%s982 + $0x6] sm:$0x7]
        %v2070 = vadd.f32 %v2069, %v2068
        %2071 = vst.msk [vmem:[%s982 + $0x6] sm:$0x7] %vm2058, %v2070
        %v2072 = vsel %vm1214, %v1204, 0.0
        %2073 = vadd.xlane.f32.xlu0 %v2072
        %v2074 = vpop.xlane.xlu0 %2073
        %v2075 = vld [vmem:[%s982 + $0x9] sm:$0x7]
        %v2076 = vadd.f32 %v2075, %v2074
        %2077 = vst.msk [vmem:[%s982 + $0x9] sm:$0x7] %vm2058, %v2076
        %v2078 = vsel %vm1214, %v1577, 0.0
        %2079 = vadd.xlane.f32.xlu0 %v2078
        %v2080 = vpop.xlane.xlu0 %2079
        %v2081 = vld [vmem:[%s982 + $0xc] sm:$0x7]
        %v2082 = vadd.f32 %v2081, %v2080
        %2083 = vst.msk [vmem:[%s982 + $0xc] sm:$0x7] %vm2058, %v2082
        %v2084 = vsel %vm1368, %v1199, 0.0
        %2085 = vadd.xlane.f32.xlu0 %v2084
        %v2086 = vpop.xlane.xlu0 %2085
        %v2087 = vld [vmem:[%s982 + $0xf] sm:$0x7f]
        %v2088 = vadd.f32 %v2087, %v2086
        %vm2089 = vcmask 6144
        %2090 = vst.msk [vmem:[%s982 + $0xf] sm:$0x7f] %vm2089, %v2088
        %s2091 = sand.u32 %s355, 1
        %s2092 = scalar_lea.sflag [#allocation4], %s2091
        %s2093 = sand.u32 %s355, 1
        %s2094 = smul.addr %s2093, 8
        %s2095 = scalar_lea.vmem [#allocation20], %s2094
        %s2096 = sand.u32 %s60, 1
        %s2097 = scalar_lea.sflag [#allocation22], %s2096
        %s2098 = sand.u32 %s383, 1
        %s2099 = scalar_lea.vmem [#allocation21], %s2098
        %s2100 = sand.u32 %s60, 1
        %s2101 = scalar_lea.sflag [#allocation22], %s2100
        %s2102 = sand.u32 %s411, 1
        %s2103 = smul.addr %s2102, 8
        %s2104 = scalar_lea.vmem [#allocation23], %s2103
        %s2105 = sand.u32 %s60, 1
        %s2106 = scalar_lea.sflag [#allocation25], %s2105
        %s2107 = sand.u32 %s439, 1
        %s2108 = smul.addr %s2107, 4
        %s2109 = scalar_lea.vmem [#allocation24], %s2108
        %s2110 = sand.u32 %s60, 1
        %s2111 = scalar_lea.sflag [#allocation25], %s2110
        %s2112 = sand.u32 %s467, 1
        %s2113 = smul.addr %s2112, 4
        %s2114 = scalar_lea.vmem [#allocation26], %s2113
        %s2115 = sand.u32 %s60, 1
        %s2116 = scalar_lea.sflag [#allocation28], %s2115
        %s2117 = sand.u32 %s495, 1
        %s2118 = smul.addr %s2117, 4
        %s2119 = scalar_lea.vmem [#allocation27], %s2118
        %s2120 = sand.u32 %s60, 1
        %s2121 = scalar_lea.sflag [#allocation28], %s2120
        %s2122 = sand.u32 %s523, 1
        %s2123 = smul.addr %s2122, 4
        %s2124 = scalar_lea.vmem [#allocation29], %s2123
        %s2125 = sand.u32 %s60, 1
        %s2126 = scalar_lea.sflag [#allocation31], %s2125
        %s2127 = sand.u32 %s551, 1
        %s2128 = smul.addr %s2127, 2
        %s2129 = scalar_lea.vmem [#allocation30], %s2128
        %s2130 = sand.u32 %s60, 1
        %s2131 = scalar_lea.sflag [#allocation31], %s2130
        %s2132 = sand.u32 %s577, 1
        %s2133 = smul.addr %s2132, 24
        %s2134 = scalar_lea.vmem [#allocation32], %s2133
        // Predicated region
        $region113: #{tpu_custom_call.1} parent=63 // pred_check
          %p2135 = pneg %p365
        $region114: #{tpu_custom_call.1} parent=63 // pred_check_branch
          %2137 = sbr.rel (%p2135) target = $region116
        $region115: #{tpu_custom_call.1} parent=63 // pred_region
          %s2139 = ssub.s32 128, 128
          %2140 = vsyncadd %s2092, %s2139
          %s2141 = smul.addr %s64, 2
          %s2142 = sadd.s32 %s65, %s2141
          %s2143 = smul.addr %s2142, 128
          %s2144 = scalar_lea.hbm %s11, %s2143
          %s2146 = sshll.u32 %s2095, 4
          %s2147 = int_to_ptr.vmem [resolvable:$true] %s2146
          %2149 = dma.vmem_to_hbm [thread:$0]  %s2147, 128, %s2144, %s2092
        $region116: #{tpu_custom_call.1} parent=63 // pred_fallthru
          _
        // Predicated region
        $region117: #{tpu_custom_call.1} parent=63 // pred_check
          %p2150 = pneg %p393
        $region118: #{tpu_custom_call.1} parent=63 // pred_check_branch
          %2152 = sbr.rel (%p2150) target = $region120
        $region119: #{tpu_custom_call.1} parent=63 // pred_region
          %s2154 = ssub.s32 16, 16
          %2155 = vsyncadd %s2097, %s2154
          %s2156 = smul.addr %s64, 2
          %s2157 = sadd.s32 %s65, %s2156
          %s2158 = smul.addr %s2157, 16
          %s2159 = scalar_lea.hbm %s12, %s2158
          %s2161 = sshll.u32 %s2099, 4
          %s2162 = int_to_ptr.vmem [resolvable:$true] %s2161
          %2164 = dma.vmem_to_hbm [thread:$0]  %s2162, 16, %s2159, %s2097
        $region120: #{tpu_custom_call.1} parent=63 // pred_fallthru
          _
        // Predicated region
        $region121: #{tpu_custom_call.1} parent=63 // pred_check
          %p2165 = pneg %p421
        $region122: #{tpu_custom_call.1} parent=63 // pred_check_branch
          %2167 = sbr.rel (%p2165) target = $region124
        $region123: #{tpu_custom_call.1} parent=63 // pred_region
          %s2169 = ssub.s32 128, 128
          %2170 = vsyncadd %s2101, %s2169
          %s2171 = smul.addr %s64, 2
          %s2172 = sadd.s32 %s65, %s2171
          %s2173 = smul.addr %s2172, 128
          %s2174 = scalar_lea.hbm %s13, %s2173
          %s2176 = sshll.u32 %s2104, 4
          %s2177 = int_to_ptr.vmem [resolvable:$true] %s2176
          %2179 = dma.vmem_to_hbm [thread:$0]  %s2177, 128, %s2174, %s2101
        $region124: #{tpu_custom_call.1} parent=63 // pred_fallthru
          _
        // Predicated region
        $region125: #{tpu_custom_call.1} parent=63 // pred_check
          %p2180 = pneg %p449
        $region126: #{tpu_custom_call.1} parent=63 // pred_check_branch
          %2182 = sbr.rel (%p2180) target = $region128
        $region127: #{tpu_custom_call.1} parent=63 // pred_region
          %s2184 = ssub.s32 64, 64
          %2185 = vsyncadd %s2106, %s2184
          %s2186 = smul.addr %s64, 2
          %s2187 = sadd.s32 %s65, %s2186
          %s2188 = smul.addr %s2187, 64
          %s2189 = scalar_lea.hbm %s14, %s2188
          %s2191 = sshll.u32 %s2109, 4
          %s2192 = int_to_ptr.vmem [resolvable:$true] %s2191
          %2194 = dma.vmem_to_hbm [thread:$0]  %s2192, 64, %s2189, %s2106
        $region128: #{tpu_custom_call.1} parent=63 // pred_fallthru
          _
        // Predicated region
        $region129: #{tpu_custom_call.1} parent=63 // pred_check
          %p2195 = pneg %p477
        $region130: #{tpu_custom_call.1} parent=63 // pred_check_branch
          %2197 = sbr.rel (%p2195) target = $region132
        $region131: #{tpu_custom_call.1} parent=63 // pred_region
          %s2199 = ssub.s32 64, 64
          %2200 = vsyncadd %s2111, %s2199
          %s2201 = smul.addr %s64, 2
          %s2202 = sadd.s32 %s65, %s2201
          %s2203 = smul.addr %s2202, 64
          %s2204 = scalar_lea.hbm %s15, %s2203
          %s2206 = sshll.u32 %s2114, 4
          %s2207 = int_to_ptr.vmem [resolvable:$true] %s2206
          %2209 = dma.vmem_to_hbm [thread:$0]  %s2207, 64, %s2204, %s2111
        $region132: #{tpu_custom_call.1} parent=63 // pred_fallthru
          _
        // Predicated region
        $region133: #{tpu_custom_call.1} parent=63 // pred_check
          %p2210 = pneg %p505
        $region134: #{tpu_custom_call.1} parent=63 // pred_check_branch
          %2212 = sbr.rel (%p2210) target = $region136
        $region135: #{tpu_custom_call.1} parent=63 // pred_region
          %s2214 = ssub.s32 64, 64
          %2215 = vsyncadd %s2116, %s2214
          %s2216 = smul.addr %s64, 2
          %s2217 = sadd.s32 %s65, %s2216
          %s2218 = smul.addr %s2217, 64
          %s2219 = scalar_lea.hbm %s16, %s2218
          %s2221 = sshll.u32 %s2119, 4
          %s2222 = int_to_ptr.vmem [resolvable:$true] %s2221
          %2224 = dma.vmem_to_hbm [thread:$0]  %s2222, 64, %s2219, %s2116
        $region136: #{tpu_custom_call.1} parent=63 // pred_fallthru
          _
        // Predicated region
        $region137: #{tpu_custom_call.1} parent=63 // pred_check
          %p2225 = pneg %p533
        $region138: #{tpu_custom_call.1} parent=63 // pred_check_branch
          %2227 = sbr.rel (%p2225) target = $region140
        $region139: #{tpu_custom_call.1} parent=63 // pred_region
          %s2229 = ssub.s32 64, 64
          %2230 = vsyncadd %s2121, %s2229
          %s2231 = smul.addr %s64, 2
          %s2232 = sadd.s32 %s65, %s2231
          %s2233 = smul.addr %s2232, 64
          %s2234 = scalar_lea.hbm %s17, %s2233
          %s2236 = sshll.u32 %s2124, 4
          %s2237 = int_to_ptr.vmem [resolvable:$true] %s2236
          %2239 = dma.vmem_to_hbm [thread:$0]  %s2237, 64, %s2234, %s2121
        $region140: #{tpu_custom_call.1} parent=63 // pred_fallthru
          _
        // Predicated region
        $region141: #{tpu_custom_call.1} parent=63 // pred_check
          %p2240 = pneg %p561
        $region142: #{tpu_custom_call.1} parent=63 // pred_check_branch
          %2242 = sbr.rel (%p2240) target = $region144
        $region143: #{tpu_custom_call.1} parent=63 // pred_region
          %s2244 = ssub.s32 32, 32
          %2245 = vsyncadd %s2126, %s2244
          %s2246 = smul.addr %s64, 2
          %s2247 = sadd.s32 %s65, %s2246
          %s2248 = smul.addr %s2247, 32
          %s2249 = scalar_lea.hbm %s18, %s2248
          %s2251 = sshll.u32 %s2129, 4
          %s2252 = int_to_ptr.vmem [resolvable:$true] %s2251
          %2254 = dma.vmem_to_hbm [thread:$0]  %s2252, 32, %s2249, %s2126
        $region144: #{tpu_custom_call.1} parent=63 // pred_fallthru
          _
        // Predicated region
        $region145: #{tpu_custom_call.1} parent=63 // pred_check
          %p2255 = pneg %p587
        $region146: #{tpu_custom_call.1} parent=63 // pred_check_branch
          %2257 = sbr.rel (%p2255) target = $region148
        $region147: #{tpu_custom_call.1} parent=63 // pred_region
          %s2259 = ssub.s32 384, 384
          %2260 = vsyncadd %s2131, %s2259
          %s2261 = smul.addr %s64, 3
          %s2262 = smul.addr %s2261, 128
          %s2263 = scalar_lea.hbm %s19, %s2262
          %s2264 = sshll.u32 %s2134, 4
          %s2265 = int_to_ptr.vmem [resolvable:$true] %s2264
          %2270 = dma.vmem_to_hbm [thread:$0]  %s2265, 384, %s2263, %s2131, 128, 128, 8
        $region148: #{tpu_custom_call.1} parent=63 // pred_fallthru
          _
      $region64: #{tpu_custom_call.1} parent=5 // pred_fallthru
        _
      %p2271 = scmp.le.s32.totalorder 2, %s55
      // Predicated region
      $region149: #{tpu_custom_call.1} parent=5 // pred_check
        %p2272 = pneg %p2271
      $region150: #{tpu_custom_call.1} parent=5 // pred_check_branch
        %2274 = sbr.rel (%p2272) target = $region152
      $region151: #{tpu_custom_call.1} parent=5 // pred_region
        %s2275 = ssub.s32 %s55, 2
        // Predicated region
        $region153: #{tpu_custom_call.1} parent=151 // pred_check
          %p2276 = pneg %p371
        $region154: #{tpu_custom_call.1} parent=151 // pred_check_branch
          %2278 = sbr.rel (%p2276) target = $region156
        $region155: #{tpu_custom_call.1} parent=151 // pred_region
          %s2279 = sand.u32 %s356, 1
          %s2280 = scalar_lea.sflag [#allocation4], %s2279
          %s2281 = sand.u32 %s356, 1
          %s2282 = smul.addr %s2281, 8
          %s2283 = scalar_lea.vmem [#allocation20], %s2282
          %2284 = dma.done %s2280, 128
        $region156: #{tpu_custom_call.1} parent=151 // pred_fallthru
          _
        // Predicated region
        $region157: #{tpu_custom_call.1} parent=151 // pred_check
          %p2285 = pneg %p399
        $region158: #{tpu_custom_call.1} parent=151 // pred_check_branch
          %2287 = sbr.rel (%p2285) target = $region160
        $region159: #{tpu_custom_call.1} parent=151 // pred_region
          %s2288 = sand.u32 %s61, 1
          %s2289 = scalar_lea.sflag [#allocation22], %s2288
          %s2290 = sand.u32 %s384, 1
          %s2291 = scalar_lea.vmem [#allocation21], %s2290
          %2292 = dma.done %s2289, 16
        $region160: #{tpu_custom_call.1} parent=151 // pred_fallthru
          _
        // Predicated region
        $region161: #{tpu_custom_call.1} parent=151 // pred_check
          %p2293 = pneg %p427
        $region162: #{tpu_custom_call.1} parent=151 // pred_check_branch
          %2295 = sbr.rel (%p2293) target = $region164
        $region163: #{tpu_custom_call.1} parent=151 // pred_region
          %s2296 = sand.u32 %s61, 1
          %s2297 = scalar_lea.sflag [#allocation22], %s2296
          %s2298 = sand.u32 %s412, 1
          %s2299 = smul.addr %s2298, 8
          %s2300 = scalar_lea.vmem [#allocation23], %s2299
          %2301 = dma.done %s2297, 128
        $region164: #{tpu_custom_call.1} parent=151 // pred_fallthru
          _
        // Predicated region
        $region165: #{tpu_custom_call.1} parent=151 // pred_check
          %p2302 = pneg %p455
        $region166: #{tpu_custom_call.1} parent=151 // pred_check_branch
          %2304 = sbr.rel (%p2302) target = $region168
        $region167: #{tpu_custom_call.1} parent=151 // pred_region
          %s2305 = sand.u32 %s61, 1
          %s2306 = scalar_lea.sflag [#allocation25], %s2305
          %s2307 = sand.u32 %s440, 1
          %s2308 = smul.addr %s2307, 4
          %s2309 = scalar_lea.vmem [#allocation24], %s2308
          %2310 = dma.done %s2306, 64
        $region168: #{tpu_custom_call.1} parent=151 // pred_fallthru
          _
        // Predicated region
        $region169: #{tpu_custom_call.1} parent=151 // pred_check
          %p2311 = pneg %p483
        $region170: #{tpu_custom_call.1} parent=151 // pred_check_branch
          %2313 = sbr.rel (%p2311) target = $region172
        $region171: #{tpu_custom_call.1} parent=151 // pred_region
          %s2314 = sand.u32 %s61, 1
          %s2315 = scalar_lea.sflag [#allocation25], %s2314
          %s2316 = sand.u32 %s468, 1
          %s2317 = smul.addr %s2316, 4
          %s2318 = scalar_lea.vmem [#allocation26], %s2317
          %2319 = dma.done %s2315, 64
        $region172: #{tpu_custom_call.1} parent=151 // pred_fallthru
          _
        // Predicated region
        $region173: #{tpu_custom_call.1} parent=151 // pred_check
          %p2320 = pneg %p511
        $region174: #{tpu_custom_call.1} parent=151 // pred_check_branch
          %2322 = sbr.rel (%p2320) target = $region176
        $region175: #{tpu_custom_call.1} parent=151 // pred_region
          %s2323 = sand.u32 %s61, 1
          %s2324 = scalar_lea.sflag [#allocation28], %s2323
          %s2325 = sand.u32 %s496, 1
          %s2326 = smul.addr %s2325, 4
          %s2327 = scalar_lea.vmem [#allocation27], %s2326
          %2328 = dma.done %s2324, 64
        $region176: #{tpu_custom_call.1} parent=151 // pred_fallthru
          _
        // Predicated region
        $region177: #{tpu_custom_call.1} parent=151 // pred_check
          %p2329 = pneg %p539
        $region178: #{tpu_custom_call.1} parent=151 // pred_check_branch
          %2331 = sbr.rel (%p2329) target = $region180
        $region179: #{tpu_custom_call.1} parent=151 // pred_region
          %s2332 = sand.u32 %s61, 1
          %s2333 = scalar_lea.sflag [#allocation28], %s2332
          %s2334 = sand.u32 %s524, 1
          %s2335 = smul.addr %s2334, 4
          %s2336 = scalar_lea.vmem [#allocation29], %s2335
          %2337 = dma.done %s2333, 64
        $region180: #{tpu_custom_call.1} parent=151 // pred_fallthru
          _
        // Predicated region
        $region181: #{tpu_custom_call.1} parent=151 // pred_check
          %p2338 = pneg %p567
        $region182: #{tpu_custom_call.1} parent=151 // pred_check_branch
          %2340 = sbr.rel (%p2338) target = $region184
        $region183: #{tpu_custom_call.1} parent=151 // pred_region
          %s2341 = sand.u32 %s61, 1
          %s2342 = scalar_lea.sflag [#allocation31], %s2341
          %s2343 = sand.u32 %s552, 1
          %s2344 = smul.addr %s2343, 2
          %s2345 = scalar_lea.vmem [#allocation30], %s2344
          %2346 = dma.done %s2342, 32
        $region184: #{tpu_custom_call.1} parent=151 // pred_fallthru
          _
        // Predicated region
        $region185: #{tpu_custom_call.1} parent=151 // pred_check
          %p2347 = pneg %p593
        $region186: #{tpu_custom_call.1} parent=151 // pred_check_branch
          %2349 = sbr.rel (%p2347) target = $region188
        $region187: #{tpu_custom_call.1} parent=151 // pred_region
          %s2350 = sand.u32 %s61, 1
          %s2351 = scalar_lea.sflag [#allocation31], %s2350
          %s2352 = sand.u32 %s578, 1
          %s2353 = smul.addr %s2352, 24
          %s2354 = scalar_lea.vmem [#allocation32], %s2353
          %2355 = dma.done %s2351, 384
        $region188: #{tpu_custom_call.1} parent=151 // pred_fallthru
          _
      $region152: #{tpu_custom_call.1} parent=5 // pred_fallthru
        _
    $region6: #{tpu_custom_call.1} parent=1 // loop_footer
      %s59 = sadd.s32 1, %s55
    $region7: #{tpu_custom_call.1} parent=1 // loop_footer_branch
      %54 = sbr.rel target = $region3
    $region8: #{tpu_custom_call.1} parent=1 // loop_exit
      _
    %2356 = vsyncpa [#allocation3], 1
    %s2357 = scalar_lea.sflag [#allocation3], 1
    %2358 = vsyncpa %s2357, 1
    %2359 = vsyncpa [#allocation6], 1
    %s2360 = scalar_lea.sflag [#allocation6], 1
    %2361 = vsyncpa %s2360, 1
    %2362 = vsyncpa [#allocation9], 1
    %s2363 = scalar_lea.sflag [#allocation9], 1
    %2364 = vsyncpa %s2363, 1
    %2365 = vsyncpa [#allocation12], 1
    %s2366 = scalar_lea.sflag [#allocation12], 1
    %2367 = vsyncpa %s2366, 1
    %2368 = vsyncpa [#allocation15], 1
    %2369 = vsyncpa [#allocation18], 1
    %2370 = vsyncpa [#allocation4], 1
    %s2371 = scalar_lea.sflag [#allocation4], 1
    %2372 = vsyncpa %s2371, 1
    %2373 = vsyncpa [#allocation22], 1
    %s2374 = scalar_lea.sflag [#allocation22], 1
    %2375 = vsyncpa %s2374, 1
    %2376 = vsyncpa [#allocation25], 1
    %s2377 = scalar_lea.sflag [#allocation25], 1
    %2378 = vsyncpa %s2377, 1
    %2379 = vsyncpa [#allocation28], 1
    %s2380 = scalar_lea.sflag [#allocation28], 1
    %2381 = vsyncpa %s2380, 1
    %2382 = vsyncpa [#allocation31], 1
    %s2383 = scalar_lea.sflag [#allocation31], 1
    %2384 = vsyncpa %s2383, 1

</llo_original>
